<compile_context>
chip_gen: v6e
topology: v6e:2x2x1
jax: 0.10.0
libtpu: 0.0.40
codegen_flags: <defaults>
</compile_context>

<pallas_src>
import math
from functools import partial

import jax
import jax.numpy as jnp
from jax.experimental import pallas as pl
from jax.experimental.pallas import tpu as pltpu

# ----------------------------- config (small) --------------------------------
B = 2            # batch
S = 8            # sequence length
H = 32           # hidden size      (module default 768, shrunk for the demo)
NH = 2           # attention heads
DH = H // NH     # head dim
F = 4 * H        # FFN intermediate
V = 100          # vocab size
C = 11           # num_classes (module default)
DR_RATE = 0.5    # dropout prob (training-mode dropout, as in the module with dr_rate set)


# ------------------------------ in-kernel math --------------------------------
def _layernorm(x, gamma, beta, eps=1e-12):
    mu = jnp.mean(x, axis=-1, keepdims=True)
    var = jnp.mean((x - mu) ** 2, axis=-1, keepdims=True)
    return (x - mu) * jax.lax.rsqrt(var + eps) * gamma + beta


def _gelu(x):
    # TODO(synk): tanh-approx GELU; reference BERT uses erf-based GELU (tiny drift).
    c = math.sqrt(2.0 / math.pi)
    return 0.5 * x * (1.0 + jnp.tanh(c * (x + 0.044715 * x * x * x)))


# ------------------ fused kernel: mask + encoder + pooler + head --------------
def _bert_classifier_kernel(valid_ref, x_ref, drop_bits_ref,
                            wqkv_ref, bqkv_ref, wo_ref, bo_ref,
                            ln1g_ref, ln1b_ref, w1_ref, b1_ref, w2_ref, b2_ref,
                            ln2g_ref, ln2b_ref, wp_ref, bp_ref, wc_ref, bc_ref,
                            out_ref, *, num_heads, head_dim, dr_rate):
    x = x_ref[...]                                   # (B, S, H) f32
    bsz, s, h = x.shape

    # --- gen_attention_mask fused in-kernel (additive key bias, no HBM mask) ---
    pos = jax.lax.broadcasted_iota(jnp.int32, (bsz, s), 1)
    key_bias = jnp.where(pos < valid_ref[...], 0.0, -1e9)        # (B, S)

    # --- QKV projection: whole batch as one (B*S, H) x (H, 3H) matmul ---
    x2 = x.reshape(bsz * s, h)
    qkv = (jnp.dot(x2.astype(jnp.bfloat16), wqkv_ref[...],
                   preferred_element_type=jnp.float32)
           + bqkv_ref[...]).reshape(bsz, s, 3 * h)
    scale = 1.0 / math.sqrt(head_dim)

    # --- attention: per-head, accumulate (p @ v_h) @ W_o[rows of head] (no concat) ---
    attn_acc = jnp.zeros((bsz * s, h), jnp.float32)
    for hd in range(num_heads):                       # static unroll (NH=2)
        lo = hd * head_dim
        qh = qkv[:, :, lo:lo + head_dim].astype(jnp.bfloat16)
        kh = qkv[:, :, h + lo:h + lo + head_dim].astype(jnp.bfloat16)
        vh = qkv[:, :, 2 * h + lo:2 * h + lo + head_dim].astype(jnp.bfloat16)
        scores = jnp.einsum('bqd,bkd->bqk', qh, kh,
                            preferred_element_type=jnp.float32) * scale
        scores = scores + key_bias[:, None, :]
        scores = scores - jnp.max(scores, axis=-1, keepdims=True)
        p = jnp.exp(scores)                                        # f32 softmax
        p = p / jnp.sum(p, axis=-1, keepdims=True)
        ctx = jnp.einsum('bqk,bkd->bqd', p.astype(jnp.bfloat16), vh,
                         preferred_element_type=jnp.float32)       # (B, S, DH)
        attn_acc = attn_acc + jnp.dot(
            ctx.reshape(bsz * s, head_dim).astype(jnp.bfloat16),
            wo_ref[lo:lo + head_dim, :],
            preferred_element_type=jnp.float32)
    attn_out = attn_acc.reshape(bsz, s, h) + bo_ref[...]

    h1 = _layernorm(x + attn_out, ln1g_ref[...], ln1b_ref[...])    # f32

    # --- FFN (2D matmuls over B*S rows) ---
    h1_2d = h1.reshape(bsz * s, h)
    mid = _gelu(jnp.dot(h1_2d.astype(jnp.bfloat16), w1_ref[...],
                        preferred_element_type=jnp.float32) + b1_ref[...])
    ffn = jnp.dot(mid.astype(jnp.bfloat16), w2_ref[...],
                  preferred_element_type=jnp.float32) + b2_ref[...]
    enc = _layernorm(h1 + ffn.reshape(bsz, s, h), ln2g_ref[...], ln2b_ref[...])

    # --- pooler ([CLS]) + dropout + classifier, all in-register (no extra DMA) ---
    cls = enc[:, 0, :]                                              # (B, H)
    pooled = jnp.tanh(jnp.dot(cls.astype(jnp.bfloat16), wp_ref[...],
                              preferred_element_type=jnp.float32) + bp_ref[...])
    if dr_rate:   # nn.Dropout(p=dr_rate), training-mode (module applies it when dr_rate set)
        thresh = jnp.uint32(min(int(dr_rate * float(2 ** 32)), 2 ** 32 - 1))
        keep = (drop_bits_ref[...] >= thresh).astype(jnp.float32)   # uint compare only
        pooled = pooled * keep * (1.0 / (1.0 - dr_rate))            # scale is a folded const
    out_ref[...] = jnp.dot(pooled.astype(jnp.bfloat16), wc_ref[...],
                           preferred_element_type=jnp.float32) + bc_ref[...]


def _full_spec(a):
    nd = a.ndim
    return pl.BlockSpec(a.shape, lambda: (0,) * nd)


# ------------------------------ parameters -----------------------------------
def init_params(key):
    ks = jax.random.split(key, 10)
    sd = 0.02
    n = lambda k, shape: jax.random.normal(k, shape, jnp.float32) * sd
    nb = lambda k, shape: (jax.random.normal(k, shape, jnp.float32) * sd).astype(jnp.bfloat16)
    return {
        "word_emb": n(ks[0], (V, H)),
        "seg_emb":  n(ks[1], (2, H)),
        "pos_emb":  n(ks[2], (S, H)),
        # matmul weights stored bf16 (MXU operands); biases / LN params stay f32
        "wqkv": nb(ks[3], (H, 3 * H)), "bqkv": jnp.zeros((1, 3 * H), jnp.float32),
        "wo":   nb(ks[4], (H, H)),     "bo":   jnp.zeros((1, H), jnp.float32),
        "ln1g": jnp.ones((1, H), jnp.float32), "ln1b": jnp.zeros((1, H), jnp.float32),
        "w1":   nb(ks[5], (H, F)),     "b1":   jnp.zeros((1, F), jnp.float32),
        "w2":   nb(ks[6], (F, H)),     "b2":   jnp.zeros((1, H), jnp.float32),
        "ln2g": jnp.ones((1, H), jnp.float32), "ln2b": jnp.zeros((1, H), jnp.float32),
        "wp":   nb(ks[7], (H, H)),     "bp":   jnp.zeros((1, H), jnp.float32),
        "wc":   nb(ks[8], (H, C)),     "bc":   jnp.zeros((1, C), jnp.float32),
    }


# ------------------------------- forward --------------------------------------
def bert_classifier_forward(params, token_ids, valid_length, segment_ids,
                            *, dr_rate=DR_RATE, dropout_key=None):
    bsz, s = token_ids.shape
    h = params["pos_emb"].shape[1]
    c = params["bc"].shape[1]

    # Embedding lookup is a gather -> kept as XLA glue.
    # TODO(synk): external pretrained KoBERT trunk replaced by this synthetic 1-layer mini-BERT.
    x = (jnp.take(params["word_emb"], token_ids, axis=0)
         + jnp.take(params["seg_emb"], segment_ids.astype(jnp.int32), axis=0)
         + params["pos_emb"][None, :, :]).astype(jnp.float32)

    valid = valid_length.reshape(bsz, 1).astype(jnp.int32)

    if dr_rate:
        if dropout_key is None:
            dropout_key = jax.random.PRNGKey(0)
        # Raw uniform bits precomputed outside (TPU PRNG primitives don't lower on the
        # interpret path); the threshold compare + scale runs inside the kernel.
        drop_bits = jax.random.bits(dropout_key, (bsz, h), dtype=jnp.uint32)
    else:
        drop_bits = jnp.zeros((bsz, h), jnp.uint32)

    weights = [params[k] for k in
               ("wqkv", "bqkv", "wo", "bo", "ln1g", "ln1b",
                "w1", "b1", "w2", "b2", "ln2g", "ln2b",
                "wp", "bp", "wc", "bc")]
    inputs = [valid, x, drop_bits] + weights

    return pl.pallas_call(
        partial(_bert_classifier_kernel, num_heads=NH, head_dim=DH, dr_rate=dr_rate),
        out_shape=jax.ShapeDtypeStruct((bsz, c), jnp.float32),
        in_specs=[_full_spec(a) for a in inputs],
        out_specs=pl.BlockSpec((bsz, c), lambda: (0, 0)),
        compiler_params=pltpu.CompilerParams(vmem_limit_bytes=32 * 1024 * 1024),
    )(*inputs)


# --------------------------------- main ---------------------------------------
if __name__ == "__main__":
    key = jax.random.PRNGKey(0)
    k_tok, k_par, k_drop = jax.random.split(key, 3)
    token_ids = jax.random.randint(k_tok, (B, S), 0, V, dtype=jnp.int32)
    valid_length = jnp.array([5, 8], dtype=jnp.int32)
    segment_ids = jnp.zeros((B, S), dtype=jnp.int32)
    params = init_params(k_par)

    logits = bert_classifier_forward(params, token_ids, valid_length, segment_ids,
                                     dr_rate=DR_RATE, dropout_key=k_drop)
    logits = jax.block_until_ready(logits)
    assert logits.shape == (B, C) and logits.dtype == jnp.float32
    print("KERNEL_OK")
</pallas_src>

<mosaic_0001>
module attributes {stable_mosaic.version = 11 : i64} {
  func.func @_bert_classifier_kernel(%arg0: memref<2x1xi32, #tpu.memory_space<vmem>>, %arg1: memref<2x8x32xf32, #tpu.memory_space<vmem>>, %arg2: memref<2x32xi32, #tpu.memory_space<vmem>>, %arg3: memref<32x96xbf16, #tpu.memory_space<vmem>>, %arg4: memref<1x96xf32, #tpu.memory_space<vmem>>, %arg5: memref<32x32xbf16, #tpu.memory_space<vmem>>, %arg6: memref<1x32xf32, #tpu.memory_space<vmem>>, %arg7: memref<1x32xf32, #tpu.memory_space<vmem>>, %arg8: memref<1x32xf32, #tpu.memory_space<vmem>>, %arg9: memref<32x128xbf16, #tpu.memory_space<vmem>>, %arg10: memref<1x128xf32, #tpu.memory_space<vmem>>, %arg11: memref<128x32xbf16, #tpu.memory_space<vmem>>, %arg12: memref<1x32xf32, #tpu.memory_space<vmem>>, %arg13: memref<1x32xf32, #tpu.memory_space<vmem>>, %arg14: memref<1x32xf32, #tpu.memory_space<vmem>>, %arg15: memref<32x32xbf16, #tpu.memory_space<vmem>>, %arg16: memref<1x32xf32, #tpu.memory_space<vmem>>, %arg17: memref<32x11xbf16, #tpu.memory_space<vmem>>, %arg18: memref<1x11xf32, #tpu.memory_space<vmem>>, %arg19: memref<2x11xf32, #tpu.memory_space<vmem>>) attributes {dimension_semantics = [], scalar_prefetch = 0 : i64, scratch_operands = 0 : i64, tpu.core_type = #tpu.core_type<tc>} {
    %c0 = arith.constant 0 : index
    %c0_0 = arith.constant 0 : index
    %c0_1 = arith.constant 0 : index
    %0 = vector.load %arg1[%c0, %c0_0, %c0_1] : memref<2x8x32xf32, #tpu.memory_space<vmem>>, vector<2x8x32xf32>
    %1 = tpu.iota {dimensions = array<i32: 1>} : vector<2x8xi32>
    %c0_2 = arith.constant 0 : index
    %c0_3 = arith.constant 0 : index
    %2 = vector.load %arg0[%c0_2, %c0_3] : memref<2x1xi32, #tpu.memory_space<vmem>>, vector<2x1xi32>
    %3 = vector.broadcast %2 : vector<2x1xi32> to vector<2x8xi32>
    %4 = arith.cmpi slt, %1, %3 : vector<2x8xi32>
    %cst = arith.constant 0.000000e+00 : f32
    %cst_4 = arith.constant -1.000000e+09 : f32
    %5 = vector.broadcast %cst : f32 to vector<2x8xf32>
    %6 = vector.broadcast %cst_4 : f32 to vector<2x8xf32>
    %7 = arith.select %4, %5, %6 : vector<2x8xi1>, vector<2x8xf32>
    %8 = vector.shape_cast %0 : vector<2x8x32xf32> to vector<16x32xf32>
    %9 = arith.truncf %8 : vector<16x32xf32> to vector<16x32xbf16>
    %c0_5 = arith.constant 0 : index
    %c0_6 = arith.constant 0 : index
    %10 = vector.load %arg3[%c0_5, %c0_6] : memref<32x96xbf16, #tpu.memory_space<vmem>>, vector<32x96xbf16>
    %cst_7 = arith.constant dense<0.000000e+00> : vector<16x96xf32>
    %11 = tpu.matmul %9, %10, %cst_7 {dimension_numbers = #tpu.dot_dimension_numbers<[1], [0], [0], [1], [0, 0, 1, 1], [], []>} : vector<16x32xbf16>, vector<32x96xbf16>, vector<16x96xf32> -> vector<16x96xf32>
    %c0_8 = arith.constant 0 : index
    %c0_9 = arith.constant 0 : index
    %12 = vector.load %arg4[%c0_8, %c0_9] : memref<1x96xf32, #tpu.memory_space<vmem>>, vector<1x96xf32>
    %13 = vector.broadcast %12 : vector<1x96xf32> to vector<16x96xf32>
    %14 = arith.addf %11, %13 : vector<16x96xf32>
    %15 = vector.shape_cast %14 : vector<16x96xf32> to vector<2x8x96xf32>
    %cst_10 = arith.constant 0.000000e+00 : f32
    %16 = vector.broadcast %cst_10 : f32 to vector<16x32xf32>
    %17 = vector.extract_strided_slice %15 {offsets = [0, 0, 0], sizes = [2, 8, 16], strides = [1, 1, 1]} : vector<2x8x96xf32> to vector<2x8x16xf32>
    %18 = arith.truncf %17 : vector<2x8x16xf32> to vector<2x8x16xbf16>
    %19 = vector.extract_strided_slice %15 {offsets = [0, 0, 32], sizes = [2, 8, 16], strides = [1, 1, 1]} : vector<2x8x96xf32> to vector<2x8x16xf32>
    %20 = arith.truncf %19 : vector<2x8x16xf32> to vector<2x8x16xbf16>
    %21 = vector.extract_strided_slice %15 {offsets = [0, 0, 64], sizes = [2, 8, 16], strides = [1, 1, 1]} : vector<2x8x96xf32> to vector<2x8x16xf32>
    %22 = arith.truncf %21 : vector<2x8x16xf32> to vector<2x8x16xbf16>
    "tpu.trace_start"() <{level = 10 : i32, message = "bqd,bkd->bqk"}> : () -> ()
    %cst_11 = arith.constant dense<0.000000e+00> : vector<2x8x8xf32>
    %23 = tpu.matmul %18, %20, %cst_11 {dimension_numbers = #tpu.dot_dimension_numbers<[2], [2], [1], [1], [0, 0, 0, 1, 1, 1], [0], [0]>} : vector<2x8x16xbf16>, vector<2x8x16xbf16>, vector<2x8x8xf32> -> vector<2x8x8xf32>
    "tpu.trace_stop"() : () -> ()
    %cst_12 = arith.constant 2.500000e-01 : f32
    %24 = vector.broadcast %cst_12 : f32 to vector<2x8x8xf32>
    %25 = arith.mulf %23, %24 : vector<2x8x8xf32>
    %26 = vector.shape_cast %7 : vector<2x8xf32> to vector<2x1x8xf32>
    %27 = vector.broadcast %26 : vector<2x1x8xf32> to vector<2x8x8xf32>
    %28 = arith.addf %25, %27 : vector<2x8x8xf32>
    %cst_13 = arith.constant dense<0xFF800000> : vector<2x8xf32>
    %29 = vector.multi_reduction <maximumf>, %28, %cst_13 [2] : vector<2x8x8xf32> to vector<2x8xf32>
    %30 = vector.shape_cast %29 : vector<2x8xf32> to vector<2x8x1xf32>
    %31 = vector.broadcast %30 : vector<2x8x1xf32> to vector<2x8x8xf32>
    %32 = arith.subf %28, %31 : vector<2x8x8xf32>
    %33 = math.exp %32 : vector<2x8x8xf32>
    %cst_14 = arith.constant dense<0.000000e+00> : vector<2x8xf32>
    %34 = vector.multi_reduction <add>, %33, %cst_14 [2] : vector<2x8x8xf32> to vector<2x8xf32>
    %35 = vector.shape_cast %34 : vector<2x8xf32> to vector<2x8x1xf32>
    %36 = vector.broadcast %35 : vector<2x8x1xf32> to vector<2x8x8xf32>
    %37 = arith.divf %33, %36 : vector<2x8x8xf32>
    %38 = arith.truncf %37 : vector<2x8x8xf32> to vector<2x8x8xbf16>
    "tpu.trace_start"() <{level = 10 : i32, message = "bqk,bkd->bqd"}> : () -> ()
    %cst_15 = arith.constant dense<0.000000e+00> : vector<2x8x16xf32>
    %39 = tpu.matmul %38, %22, %cst_15 {dimension_numbers = #tpu.dot_dimension_numbers<[2], [1], [1], [2], [0, 0, 0, 1, 1, 2], [0], [0]>} : vector<2x8x8xbf16>, vector<2x8x16xbf16>, vector<2x8x16xf32> -> vector<2x8x16xf32>
    "tpu.trace_stop"() : () -> ()
    %40 = vector.shape_cast %39 : vector<2x8x16xf32> to vector<16x16xf32>
    %41 = arith.truncf %40 : vector<16x16xf32> to vector<16x16xbf16>
    %c0_16 = arith.constant 0 : index
    %c0_17 = arith.constant 0 : index
    %42 = vector.load %arg5[%c0_16, %c0_17] : memref<32x32xbf16, #tpu.memory_space<vmem>>, vector<16x32xbf16>
    %cst_18 = arith.constant dense<0.000000e+00> : vector<16x32xf32>
    %43 = tpu.matmul %41, %42, %cst_18 {dimension_numbers = #tpu.dot_dimension_numbers<[1], [0], [0], [1], [0, 0, 1, 1], [], []>} : vector<16x16xbf16>, vector<16x32xbf16>, vector<16x32xf32> -> vector<16x32xf32>
    %44 = arith.addf %16, %43 : vector<16x32xf32>
    %45 = vector.extract_strided_slice %15 {offsets = [0, 0, 16], sizes = [2, 8, 16], strides = [1, 1, 1]} : vector<2x8x96xf32> to vector<2x8x16xf32>
    %46 = arith.truncf %45 : vector<2x8x16xf32> to vector<2x8x16xbf16>
    %47 = vector.extract_strided_slice %15 {offsets = [0, 0, 48], sizes = [2, 8, 16], strides = [1, 1, 1]} : vector<2x8x96xf32> to vector<2x8x16xf32>
    %48 = arith.truncf %47 : vector<2x8x16xf32> to vector<2x8x16xbf16>
    %49 = vector.extract_strided_slice %15 {offsets = [0, 0, 80], sizes = [2, 8, 16], strides = [1, 1, 1]} : vector<2x8x96xf32> to vector<2x8x16xf32>
    %50 = arith.truncf %49 : vector<2x8x16xf32> to vector<2x8x16xbf16>
    "tpu.trace_start"() <{level = 10 : i32, message = "bqd,bkd->bqk"}> : () -> ()
    %cst_19 = arith.constant dense<0.000000e+00> : vector<2x8x8xf32>
    %51 = tpu.matmul %46, %48, %cst_19 {dimension_numbers = #tpu.dot_dimension_numbers<[2], [2], [1], [1], [0, 0, 0, 1, 1, 1], [0], [0]>} : vector<2x8x16xbf16>, vector<2x8x16xbf16>, vector<2x8x8xf32> -> vector<2x8x8xf32>
    "tpu.trace_stop"() : () -> ()
    %cst_20 = arith.constant 2.500000e-01 : f32
    %52 = vector.broadcast %cst_20 : f32 to vector<2x8x8xf32>
    %53 = arith.mulf %51, %52 : vector<2x8x8xf32>
    %54 = vector.shape_cast %7 : vector<2x8xf32> to vector<2x1x8xf32>
    %55 = vector.broadcast %54 : vector<2x1x8xf32> to vector<2x8x8xf32>
    %56 = arith.addf %53, %55 : vector<2x8x8xf32>
    %cst_21 = arith.constant dense<0xFF800000> : vector<2x8xf32>
    %57 = vector.multi_reduction <maximumf>, %56, %cst_21 [2] : vector<2x8x8xf32> to vector<2x8xf32>
    %58 = vector.shape_cast %57 : vector<2x8xf32> to vector<2x8x1xf32>
    %59 = vector.broadcast %58 : vector<2x8x1xf32> to vector<2x8x8xf32>
    %60 = arith.subf %56, %59 : vector<2x8x8xf32>
    %61 = math.exp %60 : vector<2x8x8xf32>
    %cst_22 = arith.constant dense<0.000000e+00> : vector<2x8xf32>
    %62 = vector.multi_reduction <add>, %61, %cst_22 [2] : vector<2x8x8xf32> to vector<2x8xf32>
    %63 = vector.shape_cast %62 : vector<2x8xf32> to vector<2x8x1xf32>
    %64 = vector.broadcast %63 : vector<2x8x1xf32> to vector<2x8x8xf32>
    %65 = arith.divf %61, %64 : vector<2x8x8xf32>
    %66 = arith.truncf %65 : vector<2x8x8xf32> to vector<2x8x8xbf16>
    "tpu.trace_start"() <{level = 10 : i32, message = "bqk,bkd->bqd"}> : () -> ()
    %cst_23 = arith.constant dense<0.000000e+00> : vector<2x8x16xf32>
    %67 = tpu.matmul %66, %50, %cst_23 {dimension_numbers = #tpu.dot_dimension_numbers<[2], [1], [1], [2], [0, 0, 0, 1, 1, 2], [0], [0]>} : vector<2x8x8xbf16>, vector<2x8x16xbf16>, vector<2x8x16xf32> -> vector<2x8x16xf32>
    "tpu.trace_stop"() : () -> ()
    %68 = vector.shape_cast %67 : vector<2x8x16xf32> to vector<16x16xf32>
    %69 = arith.truncf %68 : vector<16x16xf32> to vector<16x16xbf16>
    %c16 = arith.constant 16 : index
    %c0_24 = arith.constant 0 : index
    %70 = vector.load %arg5[%c16, %c0_24] : memref<32x32xbf16, #tpu.memory_space<vmem>>, vector<16x32xbf16>
    %cst_25 = arith.constant dense<0.000000e+00> : vector<16x32xf32>
    %71 = tpu.matmul %69, %70, %cst_25 {dimension_numbers = #tpu.dot_dimension_numbers<[1], [0], [0], [1], [0, 0, 1, 1], [], []>} : vector<16x16xbf16>, vector<16x32xbf16>, vector<16x32xf32> -> vector<16x32xf32>
    %72 = arith.addf %44, %71 : vector<16x32xf32>
    %73 = vector.shape_cast %72 : vector<16x32xf32> to vector<2x8x32xf32>
    %c0_26 = arith.constant 0 : index
    %c0_27 = arith.constant 0 : index
    %74 = vector.load %arg6[%c0_26, %c0_27] : memref<1x32xf32, #tpu.memory_space<vmem>>, vector<1x32xf32>
    %75 = vector.shape_cast %74 : vector<1x32xf32> to vector<1x1x32xf32>
    %76 = vector.broadcast %75 : vector<1x1x32xf32> to vector<2x8x32xf32>
    %77 = arith.addf %73, %76 : vector<2x8x32xf32>
    %78 = arith.addf %0, %77 : vector<2x8x32xf32>
    %c0_28 = arith.constant 0 : index
    %c0_29 = arith.constant 0 : index
    %79 = vector.load %arg7[%c0_28, %c0_29] : memref<1x32xf32, #tpu.memory_space<vmem>>, vector<1x32xf32>
    %c0_30 = arith.constant 0 : index
    %c0_31 = arith.constant 0 : index
    %80 = vector.load %arg8[%c0_30, %c0_31] : memref<1x32xf32, #tpu.memory_space<vmem>>, vector<1x32xf32>
    %cst_32 = arith.constant dense<0.000000e+00> : vector<2x8xf32>
    %81 = vector.multi_reduction <add>, %78, %cst_32 [2] : vector<2x8x32xf32> to vector<2x8xf32>
    %82 = vector.shape_cast %81 : vector<2x8xf32> to vector<2x8x1xf32>
    %cst_33 = arith.constant 3.200000e+01 : f32
    %83 = vector.broadcast %cst_33 : f32 to vector<2x8x1xf32>
    %84 = arith.divf %82, %83 : vector<2x8x1xf32>
    %85 = vector.broadcast %84 : vector<2x8x1xf32> to vector<2x8x32xf32>
    %86 = arith.subf %78, %85 : vector<2x8x32xf32>
    %87 = arith.mulf %86, %86 : vector<2x8x32xf32>
    %cst_34 = arith.constant dense<0.000000e+00> : vector<2x8xf32>
    %88 = vector.multi_reduction <add>, %87, %cst_34 [2] : vector<2x8x32xf32> to vector<2x8xf32>
    %89 = vector.shape_cast %88 : vector<2x8xf32> to vector<2x8x1xf32>
    %cst_35 = arith.constant 3.200000e+01 : f32
    %90 = vector.broadcast %cst_35 : f32 to vector<2x8x1xf32>
    %91 = arith.divf %89, %90 : vector<2x8x1xf32>
    %92 = vector.broadcast %84 : vector<2x8x1xf32> to vector<2x8x32xf32>
    %93 = arith.subf %78, %92 : vector<2x8x32xf32>
    %cst_36 = arith.constant 9.99999996E-13 : f32
    %94 = vector.broadcast %cst_36 : f32 to vector<2x8x1xf32>
    %95 = arith.addf %91, %94 : vector<2x8x1xf32>
    %96 = math.rsqrt %95 : vector<2x8x1xf32>
    %97 = vector.broadcast %96 : vector<2x8x1xf32> to vector<2x8x32xf32>
    %98 = arith.mulf %93, %97 : vector<2x8x32xf32>
    %99 = vector.shape_cast %79 : vector<1x32xf32> to vector<1x1x32xf32>
    %100 = vector.broadcast %99 : vector<1x1x32xf32> to vector<2x8x32xf32>
    %101 = arith.mulf %98, %100 : vector<2x8x32xf32>
    %102 = vector.shape_cast %80 : vector<1x32xf32> to vector<1x1x32xf32>
    %103 = vector.broadcast %102 : vector<1x1x32xf32> to vector<2x8x32xf32>
    %104 = arith.addf %101, %103 : vector<2x8x32xf32>
    %105 = vector.shape_cast %104 : vector<2x8x32xf32> to vector<16x32xf32>
    %106 = arith.truncf %105 : vector<16x32xf32> to vector<16x32xbf16>
    %c0_37 = arith.constant 0 : index
    %c0_38 = arith.constant 0 : index
    %107 = vector.load %arg9[%c0_37, %c0_38] : memref<32x128xbf16, #tpu.memory_space<vmem>>, vector<32x128xbf16>
    %cst_39 = arith.constant dense<0.000000e+00> : vector<16x128xf32>
    %108 = tpu.matmul %106, %107, %cst_39 {dimension_numbers = #tpu.dot_dimension_numbers<[1], [0], [0], [1], [0, 0, 1, 1], [], []>} : vector<16x32xbf16>, vector<32x128xbf16>, vector<16x128xf32> -> vector<16x128xf32>
    %c0_40 = arith.constant 0 : index
    %c0_41 = arith.constant 0 : index
    %109 = vector.load %arg10[%c0_40, %c0_41] : memref<1x128xf32, #tpu.memory_space<vmem>>, vector<1x128xf32>
    %110 = vector.broadcast %109 : vector<1x128xf32> to vector<16x128xf32>
    %111 = arith.addf %108, %110 : vector<16x128xf32>
    %cst_42 = arith.constant 5.000000e-01 : f32
    %112 = vector.broadcast %cst_42 : f32 to vector<16x128xf32>
    %113 = arith.mulf %112, %111 : vector<16x128xf32>
    %cst_43 = arith.constant 4.471500e-02 : f32
    %114 = vector.broadcast %cst_43 : f32 to vector<16x128xf32>
    %115 = arith.mulf %114, %111 : vector<16x128xf32>
    %116 = arith.mulf %115, %111 : vector<16x128xf32>
    %117 = arith.mulf %116, %111 : vector<16x128xf32>
    %118 = arith.addf %111, %117 : vector<16x128xf32>
    %cst_44 = arith.constant 0.797884583 : f32
    %119 = vector.broadcast %cst_44 : f32 to vector<16x128xf32>
    %120 = arith.mulf %119, %118 : vector<16x128xf32>
    %121 = math.tanh %120 : vector<16x128xf32>
    %cst_45 = arith.constant 1.000000e+00 : f32
    %122 = vector.broadcast %cst_45 : f32 to vector<16x128xf32>
    %123 = arith.addf %122, %121 : vector<16x128xf32>
    %124 = arith.mulf %113, %123 : vector<16x128xf32>
    %125 = arith.truncf %124 : vector<16x128xf32> to vector<16x128xbf16>
    %c0_46 = arith.constant 0 : index
    %c0_47 = arith.constant 0 : index
    %126 = vector.load %arg11[%c0_46, %c0_47] : memref<128x32xbf16, #tpu.memory_space<vmem>>, vector<128x32xbf16>
    %cst_48 = arith.constant dense<0.000000e+00> : vector<16x32xf32>
    %127 = tpu.matmul %125, %126, %cst_48 {dimension_numbers = #tpu.dot_dimension_numbers<[1], [0], [0], [1], [0, 0, 1, 1], [], []>} : vector<16x128xbf16>, vector<128x32xbf16>, vector<16x32xf32> -> vector<16x32xf32>
    %c0_49 = arith.constant 0 : index
    %c0_50 = arith.constant 0 : index
    %128 = vector.load %arg12[%c0_49, %c0_50] : memref<1x32xf32, #tpu.memory_space<vmem>>, vector<1x32xf32>
    %129 = vector.broadcast %128 : vector<1x32xf32> to vector<16x32xf32>
    %130 = arith.addf %127, %129 : vector<16x32xf32>
    %131 = vector.shape_cast %130 : vector<16x32xf32> to vector<2x8x32xf32>
    %132 = arith.addf %104, %131 : vector<2x8x32xf32>
    %c0_51 = arith.constant 0 : index
    %c0_52 = arith.constant 0 : index
    %133 = vector.load %arg13[%c0_51, %c0_52] : memref<1x32xf32, #tpu.memory_space<vmem>>, vector<1x32xf32>
    %c0_53 = arith.constant 0 : index
    %c0_54 = arith.constant 0 : index
    %134 = vector.load %arg14[%c0_53, %c0_54] : memref<1x32xf32, #tpu.memory_space<vmem>>, vector<1x32xf32>
    %cst_55 = arith.constant dense<0.000000e+00> : vector<2x8xf32>
    %135 = vector.multi_reduction <add>, %132, %cst_55 [2] : vector<2x8x32xf32> to vector<2x8xf32>
    %136 = vector.shape_cast %135 : vector<2x8xf32> to vector<2x8x1xf32>
    %cst_56 = arith.constant 3.200000e+01 : f32
    %137 = vector.broadcast %cst_56 : f32 to vector<2x8x1xf32>
    %138 = arith.divf %136, %137 : vector<2x8x1xf32>
    %139 = vector.broadcast %138 : vector<2x8x1xf32> to vector<2x8x32xf32>
    %140 = arith.subf %132, %139 : vector<2x8x32xf32>
    %141 = arith.mulf %140, %140 : vector<2x8x32xf32>
    %cst_57 = arith.constant dense<0.000000e+00> : vector<2x8xf32>
    %142 = vector.multi_reduction <add>, %141, %cst_57 [2] : vector<2x8x32xf32> to vector<2x8xf32>
    %143 = vector.shape_cast %142 : vector<2x8xf32> to vector<2x8x1xf32>
    %cst_58 = arith.constant 3.200000e+01 : f32
    %144 = vector.broadcast %cst_58 : f32 to vector<2x8x1xf32>
    %145 = arith.divf %143, %144 : vector<2x8x1xf32>
    %146 = vector.broadcast %138 : vector<2x8x1xf32> to vector<2x8x32xf32>
    %147 = arith.subf %132, %146 : vector<2x8x32xf32>
    %cst_59 = arith.constant 9.99999996E-13 : f32
    %148 = vector.broadcast %cst_59 : f32 to vector<2x8x1xf32>
    %149 = arith.addf %145, %148 : vector<2x8x1xf32>
    %150 = math.rsqrt %149 : vector<2x8x1xf32>
    %151 = vector.broadcast %150 : vector<2x8x1xf32> to vector<2x8x32xf32>
    %152 = arith.mulf %147, %151 : vector<2x8x32xf32>
    %153 = vector.shape_cast %133 : vector<1x32xf32> to vector<1x1x32xf32>
    %154 = vector.broadcast %153 : vector<1x1x32xf32> to vector<2x8x32xf32>
    %155 = arith.mulf %152, %154 : vector<2x8x32xf32>
    %156 = vector.shape_cast %134 : vector<1x32xf32> to vector<1x1x32xf32>
    %157 = vector.broadcast %156 : vector<1x1x32xf32> to vector<2x8x32xf32>
    %158 = arith.addf %155, %157 : vector<2x8x32xf32>
    %159 = vector.extract_strided_slice %158 {offsets = [0, 0, 0], sizes = [2, 1, 32], strides = [1, 1, 1]} : vector<2x8x32xf32> to vector<2x1x32xf32>
    %160 = vector.shape_cast %159 : vector<2x1x32xf32> to vector<2x32xf32>
    %161 = arith.truncf %160 : vector<2x32xf32> to vector<2x32xbf16>
    %c0_60 = arith.constant 0 : index
    %c0_61 = arith.constant 0 : index
    %162 = vector.load %arg15[%c0_60, %c0_61] : memref<32x32xbf16, #tpu.memory_space<vmem>>, vector<32x32xbf16>
    %cst_62 = arith.constant dense<0.000000e+00> : vector<2x32xf32>
    %163 = tpu.matmul %161, %162, %cst_62 {dimension_numbers = #tpu.dot_dimension_numbers<[1], [0], [0], [1], [0, 0, 1, 1], [], []>} : vector<2x32xbf16>, vector<32x32xbf16>, vector<2x32xf32> -> vector<2x32xf32>
    %c0_63 = arith.constant 0 : index
    %c0_64 = arith.constant 0 : index
    %164 = vector.load %arg16[%c0_63, %c0_64] : memref<1x32xf32, #tpu.memory_space<vmem>>, vector<1x32xf32>
    %165 = vector.broadcast %164 : vector<1x32xf32> to vector<2x32xf32>
    %166 = arith.addf %163, %165 : vector<2x32xf32>
    %167 = math.tanh %166 : vector<2x32xf32>
    %c0_65 = arith.constant 0 : index
    %c0_66 = arith.constant 0 : index
    %168 = vector.load %arg2[%c0_65, %c0_66] : memref<2x32xi32, #tpu.memory_space<vmem>>, vector<2x32xi32>
    %c-2147483648_i32 = arith.constant -2147483648 : i32
    %169 = vector.broadcast %c-2147483648_i32 : i32 to vector<2x32xi32>
    %170 = arith.cmpi uge, %168, %169 : vector<2x32xi32>
    %171 = arith.extui %170 : vector<2x32xi1> to vector<2x32xi32>
    %172 = arith.sitofp %171 : vector<2x32xi32> to vector<2x32xf32>
    %173 = arith.mulf %167, %172 : vector<2x32xf32>
    %cst_67 = arith.constant 2.000000e+00 : f32
    %174 = vector.broadcast %cst_67 : f32 to vector<2x32xf32>
    %175 = arith.mulf %173, %174 : vector<2x32xf32>
    %176 = arith.truncf %175 : vector<2x32xf32> to vector<2x32xbf16>
    %c0_68 = arith.constant 0 : index
    %c0_69 = arith.constant 0 : index
    %177 = vector.load %arg17[%c0_68, %c0_69] : memref<32x11xbf16, #tpu.memory_space<vmem>>, vector<32x11xbf16>
    %cst_70 = arith.constant dense<0.000000e+00> : vector<2x11xf32>
    %178 = tpu.matmul %176, %177, %cst_70 {dimension_numbers = #tpu.dot_dimension_numbers<[1], [0], [0], [1], [0, 0, 1, 1], [], []>} : vector<2x32xbf16>, vector<32x11xbf16>, vector<2x11xf32> -> vector<2x11xf32>
    %c0_71 = arith.constant 0 : index
    %c0_72 = arith.constant 0 : index
    %179 = vector.load %arg18[%c0_71, %c0_72] : memref<1x11xf32, #tpu.memory_space<vmem>>, vector<1x11xf32>
    %180 = vector.broadcast %179 : vector<1x11xf32> to vector<2x11xf32>
    %181 = arith.addf %178, %180 : vector<2x11xf32>
    %c0_73 = arith.constant 0 : index
    %c0_74 = arith.constant 0 : index
    %182 = vector.load %arg19[%c0_73, %c0_74] : memref<2x11xf32, #tpu.memory_space<vmem>>, vector<2x11xf32>
    tpu.vector_store %arg19[%c0_73, %c0_74], %181 {strides = array<i32>} : memref<2x11xf32, #tpu.memory_space<vmem>>, vector<2x11xf32>,
    return
  }
}

</mosaic_0001>

<llo_original>
// kernel: tpu_custom_call.1
$region0: #{tpu_custom_call.1}
  #allocation0 [shape = 'u32[]', space=smem, size = 0x4, offset = 0x4, fixed_abs, tag = 'smem constant byte address 0x4 - core index']
  #allocation1 [shape = 'u32[144,128]{1,0:T(1,128)}', space=vmem, size = 0x12000, scoped, tag = 'internal scratch']
  %s0 = inlined_call_operand.vmem [shape: s32[2,1], index: 0, kind: input, shape index: {}]
  %s1 = inlined_call_operand.vmem [shape: f32[2,8,32], index: 1, kind: input, shape index: {}]
  %s2 = inlined_call_operand.vmem [shape: u32[2,32], index: 2, kind: input, shape index: {}]
  %s3 = inlined_call_operand.vmem [shape: bf16[32,96], index: 3, kind: input, shape index: {}]
  %s4 = inlined_call_operand.vmem [shape: f32[1,96], index: 4, kind: input, shape index: {}]
  %s5 = inlined_call_operand.vmem [shape: bf16[32,32], index: 5, kind: input, shape index: {}]
  %s6 = inlined_call_operand.vmem [shape: f32[1,32], index: 6, kind: input, shape index: {}]
  %s7 = inlined_call_operand.vmem [shape: f32[1,32], index: 7, kind: input, shape index: {}]
  %s8 = inlined_call_operand.vmem [shape: f32[1,32], index: 8, kind: input, shape index: {}]
  %s9 = inlined_call_operand.vmem [shape: bf16[32,128], index: 9, kind: input, shape index: {}]
  %s10 = inlined_call_operand.vmem [shape: f32[1,128], index: 10, kind: input, shape index: {}]
  %s11 = inlined_call_operand.vmem [shape: bf16[128,32], index: 11, kind: input, shape index: {}]
  %s12 = inlined_call_operand.vmem [shape: f32[1,32], index: 12, kind: input, shape index: {}]
  %s13 = inlined_call_operand.vmem [shape: f32[1,32], index: 13, kind: input, shape index: {}]
  %s14 = inlined_call_operand.vmem [shape: f32[1,32], index: 14, kind: input, shape index: {}]
  %s15 = inlined_call_operand.vmem [shape: bf16[32,32], index: 15, kind: input, shape index: {}]
  %s16 = inlined_call_operand.vmem [shape: f32[1,32], index: 16, kind: input, shape index: {}]
  %s17 = inlined_call_operand.vmem [shape: bf16[32,11], index: 17, kind: input, shape index: {}]
  %s18 = inlined_call_operand.vmem [shape: f32[1,11], index: 18, kind: input, shape index: {}]
  %s19 = inlined_call_operand.hbm [shape: f32[2,11], index: 19, kind: output, shape index: {}]
  %s20 = sld [smem:[#allocation0]]
  $region86: #{tpu_custom_call.1} parent=0
    _
  %s22 = ssub.s32 1, %s20
  %s23 = scalar_select 0, %s22, %s20
  $region1: #{tpu_custom_call.1} parent=0
    #allocation2 [shape = 'u8[1024]{0}', space=vmem, size = 0x400, scoped, tag = 'output window, operand 0, single buffered']
    #allocation3 [shape = 's32[1]{0}', space=sflag, size = 0x4, scoped, tag = 'scoped memory for tpu_custom_call.1']
    %24 = vsyncpa [#allocation3], 0
    // Predicated region
    $region2: #{tpu_custom_call.1} parent=1 // pred_check
      _
    $region3: #{tpu_custom_call.1} parent=1 // pred_check_branch
      %26 = sbr.rel (0) target = $region5
    $region4: #{tpu_custom_call.1} parent=1 // pred_region
      _
    $region5: #{tpu_custom_call.1} parent=1 // pred_fallthru
      _
    // Predicated region
    $region6: #{tpu_custom_call.1} parent=1 // pred_check
      _
    $region7: #{tpu_custom_call.1} parent=1 // pred_check_branch
      %28 = sbr.rel (0) target = $region9
    $region8: #{tpu_custom_call.1} parent=1 // pred_region
      _
    $region9: #{tpu_custom_call.1} parent=1 // pred_fallthru
      _
    // Predicated region
    $region10: #{tpu_custom_call.1} parent=1 // pred_check
      _
    $region11: #{tpu_custom_call.1} parent=1 // pred_check_branch
      %30 = sbr.rel (0) target = $region13
    $region12: #{tpu_custom_call.1} parent=1 // pred_region
      _
    $region13: #{tpu_custom_call.1} parent=1 // pred_fallthru
      _
    // Predicated region
    $region14: #{tpu_custom_call.1} parent=1 // pred_check
      _
    $region15: #{tpu_custom_call.1} parent=1 // pred_check_branch
      %32 = sbr.rel (0) target = $region17
    $region16: #{tpu_custom_call.1} parent=1 // pred_region
      _
    $region17: #{tpu_custom_call.1} parent=1 // pred_fallthru
      _
    // Predicated region
    $region18: #{tpu_custom_call.1} parent=1 // pred_check
      _
    $region19: #{tpu_custom_call.1} parent=1 // pred_check_branch
      %34 = sbr.rel (0) target = $region21
    $region20: #{tpu_custom_call.1} parent=1 // pred_region
      _
    $region21: #{tpu_custom_call.1} parent=1 // pred_fallthru
      _
    // Predicated region
    $region22: #{tpu_custom_call.1} parent=1 // pred_check
      _
    $region23: #{tpu_custom_call.1} parent=1 // pred_check_branch
      %36 = sbr.rel (0) target = $region25
    $region24: #{tpu_custom_call.1} parent=1 // pred_region
      _
    $region25: #{tpu_custom_call.1} parent=1 // pred_fallthru
      _
    // Predicated region
    $region26: #{tpu_custom_call.1} parent=1 // pred_check
      _
    $region27: #{tpu_custom_call.1} parent=1 // pred_check_branch
      %38 = sbr.rel (0) target = $region29
    $region28: #{tpu_custom_call.1} parent=1 // pred_region
      _
    $region29: #{tpu_custom_call.1} parent=1 // pred_fallthru
      _
    // Predicated region
    $region30: #{tpu_custom_call.1} parent=1 // pred_check
      _
    $region31: #{tpu_custom_call.1} parent=1 // pred_check_branch
      %40 = sbr.rel (0) target = $region33
    $region32: #{tpu_custom_call.1} parent=1 // pred_region
      _
    $region33: #{tpu_custom_call.1} parent=1 // pred_fallthru
      _
    // Predicated region
    $region34: #{tpu_custom_call.1} parent=1 // pred_check
      _
    $region35: #{tpu_custom_call.1} parent=1 // pred_check_branch
      %42 = sbr.rel (0) target = $region37
    $region36: #{tpu_custom_call.1} parent=1 // pred_region
      _
    $region37: #{tpu_custom_call.1} parent=1 // pred_fallthru
      _
    // Predicated region
    $region38: #{tpu_custom_call.1} parent=1 // pred_check
      _
    $region39: #{tpu_custom_call.1} parent=1 // pred_check_branch
      %44 = sbr.rel (0) target = $region41
    $region40: #{tpu_custom_call.1} parent=1 // pred_region
      _
    $region41: #{tpu_custom_call.1} parent=1 // pred_fallthru
      _
    // Predicated region
    $region42: #{tpu_custom_call.1} parent=1 // pred_check
      _
    $region43: #{tpu_custom_call.1} parent=1 // pred_check_branch
      %46 = sbr.rel (0) target = $region45
    $region44: #{tpu_custom_call.1} parent=1 // pred_region
      _
    $region45: #{tpu_custom_call.1} parent=1 // pred_fallthru
      _
    // Predicated region
    $region46: #{tpu_custom_call.1} parent=1 // pred_check
      _
    $region47: #{tpu_custom_call.1} parent=1 // pred_check_branch
      %48 = sbr.rel (0) target = $region49
    $region48: #{tpu_custom_call.1} parent=1 // pred_region
      _
    $region49: #{tpu_custom_call.1} parent=1 // pred_fallthru
      _
    // Predicated region
    $region50: #{tpu_custom_call.1} parent=1 // pred_check
      _
    $region51: #{tpu_custom_call.1} parent=1 // pred_check_branch
      %50 = sbr.rel (0) target = $region53
    $region52: #{tpu_custom_call.1} parent=1 // pred_region
      _
    $region53: #{tpu_custom_call.1} parent=1 // pred_fallthru
      _
    // Predicated region
    $region54: #{tpu_custom_call.1} parent=1 // pred_check
      _
    $region55: #{tpu_custom_call.1} parent=1 // pred_check_branch
      %52 = sbr.rel (0) target = $region57
    $region56: #{tpu_custom_call.1} parent=1 // pred_region
      _
    $region57: #{tpu_custom_call.1} parent=1 // pred_fallthru
      _
    // Predicated region
    $region58: #{tpu_custom_call.1} parent=1 // pred_check
      _
    $region59: #{tpu_custom_call.1} parent=1 // pred_check_branch
      %54 = sbr.rel (0) target = $region61
    $region60: #{tpu_custom_call.1} parent=1 // pred_region
      _
    $region61: #{tpu_custom_call.1} parent=1 // pred_fallthru
      _
    // Predicated region
    $region62: #{tpu_custom_call.1} parent=1 // pred_check
      _
    $region63: #{tpu_custom_call.1} parent=1 // pred_check_branch
      %56 = sbr.rel (0) target = $region65
    $region64: #{tpu_custom_call.1} parent=1 // pred_region
      _
    $region65: #{tpu_custom_call.1} parent=1 // pred_fallthru
      _
    // Predicated region
    $region66: #{tpu_custom_call.1} parent=1 // pred_check
      _
    $region67: #{tpu_custom_call.1} parent=1 // pred_check_branch
      %58 = sbr.rel (0) target = $region69
    $region68: #{tpu_custom_call.1} parent=1 // pred_region
      _
    $region69: #{tpu_custom_call.1} parent=1 // pred_fallthru
      _
    // Predicated region
    $region70: #{tpu_custom_call.1} parent=1 // pred_check
      _
    $region71: #{tpu_custom_call.1} parent=1 // pred_check_branch
      %60 = sbr.rel (0) target = $region73
    $region72: #{tpu_custom_call.1} parent=1 // pred_region
      _
    $region73: #{tpu_custom_call.1} parent=1 // pred_fallthru
      _
    // Predicated region
    $region74: #{tpu_custom_call.1} parent=1 // pred_check
      _
    $region75: #{tpu_custom_call.1} parent=1 // pred_check_branch
      %62 = sbr.rel (0) target = $region77
    $region76: #{tpu_custom_call.1} parent=1 // pred_region
      _
    $region77: #{tpu_custom_call.1} parent=1 // pred_fallthru
      _
    %v64 = vld [vmem:[%s1] sm:$0xff]
    %v65 = vld [vmem:[%s1 + $0x8] sm:$0xff]
    %v66 = vlaneseq
    %v67 = vand.u32 %v66, 127
    %v68 = vld [vmem:[%s0] sm:$0x3]
    %69 = vset.pattern.permute.xlu0 0
    %70 = vperm.xlu0 %69, %v68
    %v71 = vpop.permute.xlu0 %70
    %vm72 = vcmp.lt.s32.totalorder %v67, %v71
    %v73 = vsel %vm72, 0.0, -1e+09
    %v74 = vpack.c.bf16 %v65, %v64
    %v75 = vld [vmem:[%s3] sm:$0xf]
    %v76 = vld [vmem:[%s3 + $0x4] sm:$0xf]
    %v77 = vld [vmem:[%s3 + $0x8] sm:$0xf]
    %v78 = vld [vmem:[%s3 + $0xc] sm:$0xf]
    %v79 = vld [vmem:[%s4] sm:$0x1]
    %v81 = vlaneseq
    %v82 = vshrl.u32 %v81, 7
    %v83 = vsub.s32 0, %v82
    %v84 = vrot.slane %v79, %v83
    %v90 = vunpack.c.l.b16 %v75
    %v91 = vunpack.c.l.b16 %v76
    %v92 = vunpack.c.l.b16 %v77
    %v93 = vunpack.c.l.b16 %v78
    %v94 = vpack.c.b16 %v91, %v90
    %v95 = vpack.c.b16 %v93, %v92
    %vm98 = vcmask 261120
    %v100 = vsel %vm98, %v74, 0
    %102 = vmatprep.subr.bf16.mxu0 0
    %103 = vmatpush1.bf16.msra.mxu0 0
    %104 = vmatprep.subr.bf16.mxu0 0
    %105 = vmatpush1.bf16.msra.mxu0 0
    %106 = vmatprep.subr.bf16.mxu0 0
    %107 = vmatpush1.bf16.msra.mxu0 0
    %108 = vmatprep.subr.bf16.mxu0 0
    %109 = vmatpush1.bf16.msra.mxu0 0
    %110 = vmatprep.subr.bf16.mxu0 0
    %111 = vmatpush1.bf16.msra.mxu0 0
    %112 = vmatprep.subr.bf16.mxu0 0
    %113 = vmatpush1.bf16.msra.mxu0 0
    %114 = vmatprep.subr.bf16.mxu0 0
    %115 = vmatpush1.bf16.msra.mxu0 %v95
    %116 = vmatprep.subr.bf16.mxu0 0
    %117 = vmatpush1.bf16.msra.mxu0 %v94
    %118 = vmatprep.subr.bf16.mxu0 0
    %119 = vmatpush2.bf16.msra.mxu0 0
    %120 = vmatprep.subr.bf16.mxu0 0
    %121 = vmatpush2.bf16.msra.mxu0 0
    %122 = vmatprep.subr.bf16.mxu0 0
    %123 = vmatpush2.bf16.msra.mxu0 0
    %124 = vmatprep.subr.bf16.mxu0 0
    %125 = vmatpush2.bf16.msra.mxu0 0
    %126 = vmatprep.subr.bf16.mxu0 0
    %127 = vmatpush2.bf16.msra.mxu0 0
    %128 = vmatprep.subr.bf16.mxu0 0
    %129 = vmatpush2.bf16.msra.mxu0 0
    %130 = vmatprep.subr.bf16.mxu0 0
    %131 = vmatpush2.bf16.msra.mxu0 0
    %132 = vmatprep.subr.bf16.mxu0 0
    %133 = vmatpush2.bf16.msra.mxu0 0
    %134 = vmatprep.mubr.bf16.mxu0 0
    %135 = vmatmul.mubr.bf16.gmra.mxu0 %v100
    %v136 = vpop.f32.mrf.mxu0
    %v137 = vadd.f32 %v84, %v136
    %v138 = vpop.f32.mrf.mxu0
    %v139 = vpop.f32.mrf.mxu0
    %v140 = vadd.f32 %v84, %v139
    %v141 = vpop.f32.mrf.mxu0
    %142 = vdwg.mxu0
    %v143 = vpack.c.bf16 %v137, %v137
    %v144 = vpack.c.bf16 %v140, %v140
    %146 = vrot.lane.b32.xlu0 %v143, 96
    %v147 = vpop.permute.xlu0 %146
    %vm148 = vcmask 130048
    %v150 = vsel %vm148, %v143, 0
    %v153 = vsel %vm148, %v147, 0
    %155 = vmatprep.subr.bf16.mxu0 0
    %156 = vmatpush1.bf16.xpose.msra.mxu0 0
    %157 = vmatprep.subr.bf16.mxu0 0
    %158 = vmatpush1.bf16.xpose.msra.mxu0 0
    %159 = vmatprep.subr.bf16.mxu0 0
    %160 = vmatpush1.bf16.xpose.msra.mxu0 0
    %161 = vmatprep.subr.bf16.mxu0 0
    %162 = vmatpush1.bf16.xpose.msra.mxu0 0
    %163 = vmatprep.subr.bf16.mxu0 0
    %164 = vmatpush1.bf16.xpose.msra.mxu0 0
    %165 = vmatprep.subr.bf16.mxu0 0
    %166 = vmatpush1.bf16.xpose.msra.mxu0 0
    %167 = vmatprep.subr.bf16.mxu0 0
    %168 = vmatpush1.bf16.xpose.msra.mxu0 0
    %169 = vmatprep.subr.bf16.mxu0 0
    %170 = vmatpush1.bf16.xpose.msra.mxu0 %v153
    %171 = vmatprep.subr.bf16.mxu0 0
    %172 = vmatpush2.bf16.xpose.msra.mxu0 0
    %173 = vmatprep.subr.bf16.mxu0 0
    %174 = vmatpush2.bf16.xpose.msra.mxu0 0
    %175 = vmatprep.subr.bf16.mxu0 0
    %176 = vmatpush2.bf16.xpose.msra.mxu0 0
    %177 = vmatprep.subr.bf16.mxu0 0
    %178 = vmatpush2.bf16.xpose.msra.mxu0 0
    %179 = vmatprep.subr.bf16.mxu0 0
    %180 = vmatpush2.bf16.xpose.msra.mxu0 0
    %181 = vmatprep.subr.bf16.mxu0 0
    %182 = vmatpush2.bf16.xpose.msra.mxu0 0
    %183 = vmatprep.subr.bf16.mxu0 0
    %184 = vmatpush2.bf16.xpose.msra.mxu0 0
    %185 = vmatprep.subr.bf16.mxu0 0
    %186 = vmatpush2.bf16.xpose.msra.mxu0 0
    %187 = vmatprep.mubr.bf16.mxu0 0
    %188 = vmatmul.mubr.bf16.gmra.mxu0 %v150
    %v189 = vpop.f32.mrf.mxu0
    %v190 = vadd.f32 0.0, %v189
    %v191 = vpop.f32.mrf.mxu0
    %v192 = vpop.f32.mrf.mxu0
    %v193 = vpop.f32.mrf.mxu0
    %194 = vdwg.mxu0
    %196 = vrot.lane.b32.xlu0 %v144, 96
    %v197 = vpop.permute.xlu0 %196
    %v199 = vsel %vm148, %v144, 0
    %v202 = vsel %vm148, %v197, 0
    %204 = vmatprep.subr.bf16.mxu0 0
    %205 = vmatpush1.bf16.xpose.msra.mxu0 0
    %206 = vmatprep.subr.bf16.mxu0 0
    %207 = vmatpush1.bf16.xpose.msra.mxu0 0
    %208 = vmatprep.subr.bf16.mxu0 0
    %209 = vmatpush1.bf16.xpose.msra.mxu0 0
    %210 = vmatprep.subr.bf16.mxu0 0
    %211 = vmatpush1.bf16.xpose.msra.mxu0 0
    %212 = vmatprep.subr.bf16.mxu0 0
    %213 = vmatpush1.bf16.xpose.msra.mxu0 0
    %214 = vmatprep.subr.bf16.mxu0 0
    %215 = vmatpush1.bf16.xpose.msra.mxu0 0
    %216 = vmatprep.subr.bf16.mxu0 0
    %217 = vmatpush1.bf16.xpose.msra.mxu0 0
    %218 = vmatprep.subr.bf16.mxu0 0
    %219 = vmatpush1.bf16.xpose.msra.mxu0 %v202
    %220 = vmatprep.subr.bf16.mxu0 0
    %221 = vmatpush2.bf16.xpose.msra.mxu0 0
    %222 = vmatprep.subr.bf16.mxu0 0
    %223 = vmatpush2.bf16.xpose.msra.mxu0 0
    %224 = vmatprep.subr.bf16.mxu0 0
    %225 = vmatpush2.bf16.xpose.msra.mxu0 0
    %226 = vmatprep.subr.bf16.mxu0 0
    %227 = vmatpush2.bf16.xpose.msra.mxu0 0
    %228 = vmatprep.subr.bf16.mxu0 0
    %229 = vmatpush2.bf16.xpose.msra.mxu0 0
    %230 = vmatprep.subr.bf16.mxu0 0
    %231 = vmatpush2.bf16.xpose.msra.mxu0 0
    %232 = vmatprep.subr.bf16.mxu0 0
    %233 = vmatpush2.bf16.xpose.msra.mxu0 0
    %234 = vmatprep.subr.bf16.mxu0 0
    %235 = vmatpush2.bf16.xpose.msra.mxu0 0
    %236 = vmatprep.mubr.bf16.mxu0 0
    %237 = vmatmul.mubr.bf16.gmra.mxu0 %v199
    %v238 = vpop.f32.mrf.mxu0
    %v239 = vadd.f32 0.0, %v238
    %v240 = vpop.f32.mrf.mxu0
    %v241 = vpop.f32.mrf.mxu0
    %v242 = vpop.f32.mrf.mxu0
    %243 = vdwg.mxu0
    %v244 = vmul.f32 %v190, 0.25
    %v245 = vmul.f32 %v239, 0.25
    %v248 = vunpack.c.l.s4 1966171168
    %v249 = vunpack.c.0.s8 %v248
    %v250 = vlaneseq
    %v251 = vshrl.u32 %v250, 7
    %v252 = vsub.s32 %v249, %v251
    %v253 = vrot.slane %v73, %v252
    %v254 = vcombine.high %v253, %v253
    %v256 = vunpack.c.l.s4 1966171168
    %v257 = vunpack.c.0.s8 %v256
    %v258 = vlaneseq
    %v259 = vshrl.u32 %v258, 7
    %v260 = vsub.s32 %v257, %v259
    %v261 = vrot.slane %v253, %v260
    %v263 = vunpack.c.l.s4 1966171168
    %v264 = vunpack.c.0.s8 %v263
    %v265 = vlaneseq
    %v266 = vshrl.u32 %v265, 7
    %v267 = vsub.s32 %v264, %v266
    %v268 = vrot.slane %v254, %v267
    %v269 = vlaneseq
    %v270 = vshrl.u32 %v269, 7
    %v271 = vsub.s32 0, %v270
    %v272 = vrot.slane %v261, %v271
    %v273 = vlaneseq
    %v274 = vshrl.u32 %v273, 7
    %v275 = vsub.s32 0, %v274
    %v276 = vrot.slane %v268, %v275
    %v279 = vadd.f32 %v244, %v272
    %v280 = vadd.f32 %v245, %v276
    %vm281 = vcmask 64512
    %v282 = vsel %vm281, %v279, -inf
    %283 = vmax.xlane.f32.xlu0 %v282
    %v284 = vpop.xlane.xlu0 %283
    %v285 = vsel %vm281, %v280, -inf
    %286 = vmax.xlane.f32.xlu0 %v285
    %v287 = vpop.xlane.xlu0 %286
    %v288 = vsub.f32 %v279, %v284
    %v289 = vsub.f32 %v280, %v287
    %v290 = vmul.f32 %v288, 1.442695
    %v291 = vpow.pop %v290
    %v292 = vmul.f32 %v289, 1.442695
    %v293 = vpow.pop %v292
    %v294 = vsel %vm281, %v291, 0.0
    %295 = vadd.xlane.f32.xlu0 %v294
    %v296 = vpop.xlane.xlu0 %295
    %v297 = vsel %vm281, %v293, 0.0
    %298 = vadd.xlane.f32.xlu0 %v297
    %v299 = vpop.xlane.xlu0 %298
    %v300 = vrcp.pop %v296
    %v301 = vmul.f32 %v291, %v300
    %v302 = vrcp.pop %v299
    %v303 = vmul.f32 %v293, %v302
    %v304 = vpack.c.bf16 %v301, %v301
    %v305 = vpack.c.bf16 %v303, %v303
    %306 = vrot.lane.b32.xlu0 %v143, 64
    %v307 = vpop.permute.xlu0 %306
    %v309 = vsel %vm281, %v304, 0
    %vm311 = vcmask 1043456
    %v313 = vsel %vm311, %v307, 0
    %315 = vmatprep.subr.bf16.mxu0 0
    %316 = vmatpush1.bf16.msra.mxu0 0
    %317 = vmatprep.subr.bf16.mxu0 0
    %318 = vmatpush1.bf16.msra.mxu0 0
    %319 = vmatprep.subr.bf16.mxu0 0
    %320 = vmatpush1.bf16.msra.mxu0 0
    %321 = vmatprep.subr.bf16.mxu0 0
    %322 = vmatpush1.bf16.msra.mxu0 0
    %323 = vmatprep.subr.bf16.mxu0 0
    %324 = vmatpush1.bf16.msra.mxu0 0
    %325 = vmatprep.subr.bf16.mxu0 0
    %326 = vmatpush1.bf16.msra.mxu0 0
    %327 = vmatprep.subr.bf16.mxu0 0
    %328 = vmatpush1.bf16.msra.mxu0 0
    %329 = vmatprep.subr.bf16.mxu0 0
    %330 = vmatpush1.bf16.msra.mxu0 %v313
    %331 = vmatprep.subr.bf16.mxu0 0
    %332 = vmatpush2.bf16.msra.mxu0 0
    %333 = vmatprep.subr.bf16.mxu0 0
    %334 = vmatpush2.bf16.msra.mxu0 0
    %335 = vmatprep.subr.bf16.mxu0 0
    %336 = vmatpush2.bf16.msra.mxu0 0
    %337 = vmatprep.subr.bf16.mxu0 0
    %338 = vmatpush2.bf16.msra.mxu0 0
    %339 = vmatprep.subr.bf16.mxu0 0
    %340 = vmatpush2.bf16.msra.mxu0 0
    %341 = vmatprep.subr.bf16.mxu0 0
    %342 = vmatpush2.bf16.msra.mxu0 0
    %343 = vmatprep.subr.bf16.mxu0 0
    %344 = vmatpush2.bf16.msra.mxu0 0
    %345 = vmatprep.subr.bf16.mxu0 0
    %346 = vmatpush2.bf16.msra.mxu0 0
    %347 = vmatprep.mubr.bf16.mxu0 0
    %348 = vmatmul.mubr.bf16.gmra.mxu0 %v309
    %v349 = vpop.f32.mrf.mxu0
    %v350 = vadd.f32 0.0, %v349
    %v351 = vpop.f32.mrf.mxu0
    %v352 = vpop.f32.mrf.mxu0
    %v353 = vpop.f32.mrf.mxu0
    %354 = vdwg.mxu0
    %355 = vrot.lane.b32.xlu0 %v144, 64
    %v356 = vpop.permute.xlu0 %355
    %v358 = vsel %vm281, %v305, 0
    %v361 = vsel %vm311, %v356, 0
    %363 = vmatprep.subr.bf16.mxu0 0
    %364 = vmatpush1.bf16.msra.mxu0 0
    %365 = vmatprep.subr.bf16.mxu0 0
    %366 = vmatpush1.bf16.msra.mxu0 0
    %367 = vmatprep.subr.bf16.mxu0 0
    %368 = vmatpush1.bf16.msra.mxu0 0
    %369 = vmatprep.subr.bf16.mxu0 0
    %370 = vmatpush1.bf16.msra.mxu0 0
    %371 = vmatprep.subr.bf16.mxu0 0
    %372 = vmatpush1.bf16.msra.mxu0 0
    %373 = vmatprep.subr.bf16.mxu0 0
    %374 = vmatpush1.bf16.msra.mxu0 0
    %375 = vmatprep.subr.bf16.mxu0 0
    %376 = vmatpush1.bf16.msra.mxu0 0
    %377 = vmatprep.subr.bf16.mxu0 0
    %378 = vmatpush1.bf16.msra.mxu0 %v361
    %379 = vmatprep.subr.bf16.mxu0 0
    %380 = vmatpush2.bf16.msra.mxu0 0
    %381 = vmatprep.subr.bf16.mxu0 0
    %382 = vmatpush2.bf16.msra.mxu0 0
    %383 = vmatprep.subr.bf16.mxu0 0
    %384 = vmatpush2.bf16.msra.mxu0 0
    %385 = vmatprep.subr.bf16.mxu0 0
    %386 = vmatpush2.bf16.msra.mxu0 0
    %387 = vmatprep.subr.bf16.mxu0 0
    %388 = vmatpush2.bf16.msra.mxu0 0
    %389 = vmatprep.subr.bf16.mxu0 0
    %390 = vmatpush2.bf16.msra.mxu0 0
    %391 = vmatprep.subr.bf16.mxu0 0
    %392 = vmatpush2.bf16.msra.mxu0 0
    %393 = vmatprep.subr.bf16.mxu0 0
    %394 = vmatpush2.bf16.msra.mxu0 0
    %395 = vmatprep.mubr.bf16.mxu0 0
    %396 = vmatmul.mubr.bf16.gmra.mxu0 %v358
    %v397 = vpop.f32.mrf.mxu0
    %v398 = vadd.f32 0.0, %v397
    %v399 = vpop.f32.mrf.mxu0
    %v400 = vpop.f32.mrf.mxu0
    %v401 = vpop.f32.mrf.mxu0
    %402 = vdwg.mxu0
    %v403 = vpack.c.bf16 %v398, %v350
    %v404 = vld [vmem:[%s5] sm:$0xf]
    %v405 = vld [vmem:[%s5 + $0x4] sm:$0xf]
    %406 = vrot.lane.b32.xlu0 %v143, 112
    %v407 = vpop.permute.xlu0 %406
    %408 = vrot.lane.b32.xlu0 %v143, 80
    %v409 = vpop.permute.xlu0 %408
    %v411 = vsel %vm148, %v407, 0
    %v414 = vsel %vm148, %v409, 0
    %416 = vmatprep.subr.bf16.mxu0 0
    %417 = vmatpush1.bf16.xpose.msra.mxu0 0
    %418 = vmatprep.subr.bf16.mxu0 0
    %419 = vmatpush1.bf16.xpose.msra.mxu0 0
    %420 = vmatprep.subr.bf16.mxu0 0
    %421 = vmatpush1.bf16.xpose.msra.mxu0 0
    %422 = vmatprep.subr.bf16.mxu0 0
    %423 = vmatpush1.bf16.xpose.msra.mxu0 0
    %424 = vmatprep.subr.bf16.mxu0 0
    %425 = vmatpush1.bf16.xpose.msra.mxu0 0
    %426 = vmatprep.subr.bf16.mxu0 0
    %427 = vmatpush1.bf16.xpose.msra.mxu0 0
    %428 = vmatprep.subr.bf16.mxu0 0
    %429 = vmatpush1.bf16.xpose.msra.mxu0 0
    %430 = vmatprep.subr.bf16.mxu0 0
    %431 = vmatpush1.bf16.xpose.msra.mxu0 %v414
    %432 = vmatprep.subr.bf16.mxu0 0
    %433 = vmatpush2.bf16.xpose.msra.mxu0 0
    %434 = vmatprep.subr.bf16.mxu0 0
    %435 = vmatpush2.bf16.xpose.msra.mxu0 0
    %436 = vmatprep.subr.bf16.mxu0 0
    %437 = vmatpush2.bf16.xpose.msra.mxu0 0
    %438 = vmatprep.subr.bf16.mxu0 0
    %439 = vmatpush2.bf16.xpose.msra.mxu0 0
    %440 = vmatprep.subr.bf16.mxu0 0
    %441 = vmatpush2.bf16.xpose.msra.mxu0 0
    %442 = vmatprep.subr.bf16.mxu0 0
    %443 = vmatpush2.bf16.xpose.msra.mxu0 0
    %444 = vmatprep.subr.bf16.mxu0 0
    %445 = vmatpush2.bf16.xpose.msra.mxu0 0
    %446 = vmatprep.subr.bf16.mxu0 0
    %447 = vmatpush2.bf16.xpose.msra.mxu0 0
    %448 = vmatprep.mubr.bf16.mxu0 0
    %449 = vmatmul.mubr.bf16.gmra.mxu0 %v411
    %v450 = vpop.f32.mrf.mxu0
    %v451 = vadd.f32 0.0, %v450
    %v452 = vpop.f32.mrf.mxu0
    %v453 = vpop.f32.mrf.mxu0
    %v454 = vpop.f32.mrf.mxu0
    %455 = vdwg.mxu0
    %456 = vrot.lane.b32.xlu0 %v144, 112
    %v457 = vpop.permute.xlu0 %456
    %458 = vrot.lane.b32.xlu0 %v144, 80
    %v459 = vpop.permute.xlu0 %458
    %v461 = vsel %vm148, %v457, 0
    %v464 = vsel %vm148, %v459, 0
    %466 = vmatprep.subr.bf16.mxu0 0
    %467 = vmatpush1.bf16.xpose.msra.mxu0 0
    %468 = vmatprep.subr.bf16.mxu0 0
    %469 = vmatpush1.bf16.xpose.msra.mxu0 0
    %470 = vmatprep.subr.bf16.mxu0 0
    %471 = vmatpush1.bf16.xpose.msra.mxu0 0
    %472 = vmatprep.subr.bf16.mxu0 0
    %473 = vmatpush1.bf16.xpose.msra.mxu0 0
    %474 = vmatprep.subr.bf16.mxu0 0
    %475 = vmatpush1.bf16.xpose.msra.mxu0 0
    %476 = vmatprep.subr.bf16.mxu0 0
    %477 = vmatpush1.bf16.xpose.msra.mxu0 0
    %478 = vmatprep.subr.bf16.mxu0 0
    %479 = vmatpush1.bf16.xpose.msra.mxu0 0
    %480 = vmatprep.subr.bf16.mxu0 0
    %481 = vmatpush1.bf16.xpose.msra.mxu0 %v464
    %482 = vmatprep.subr.bf16.mxu0 0
    %483 = vmatpush2.bf16.xpose.msra.mxu0 0
    %484 = vmatprep.subr.bf16.mxu0 0
    %485 = vmatpush2.bf16.xpose.msra.mxu0 0
    %486 = vmatprep.subr.bf16.mxu0 0
    %487 = vmatpush2.bf16.xpose.msra.mxu0 0
    %488 = vmatprep.subr.bf16.mxu0 0
    %489 = vmatpush2.bf16.xpose.msra.mxu0 0
    %490 = vmatprep.subr.bf16.mxu0 0
    %491 = vmatpush2.bf16.xpose.msra.mxu0 0
    %492 = vmatprep.subr.bf16.mxu0 0
    %493 = vmatpush2.bf16.xpose.msra.mxu0 0
    %494 = vmatprep.subr.bf16.mxu0 0
    %495 = vmatpush2.bf16.xpose.msra.mxu0 0
    %496 = vmatprep.subr.bf16.mxu0 0
    %497 = vmatpush2.bf16.xpose.msra.mxu0 0
    %498 = vmatprep.mubr.bf16.mxu0 0
    %499 = vmatmul.mubr.bf16.gmra.mxu0 %v461
    %v500 = vpop.f32.mrf.mxu0
    %v501 = vadd.f32 0.0, %v500
    %v502 = vpop.f32.mrf.mxu0
    %v503 = vpop.f32.mrf.mxu0
    %v504 = vpop.f32.mrf.mxu0
    %505 = vdwg.mxu0
    %v506 = vmul.f32 %v451, 0.25
    %v507 = vmul.f32 %v501, 0.25
    %v508 = vadd.f32 %v506, %v272
    %v509 = vadd.f32 %v507, %v276
    %v510 = vsel %vm281, %v508, -inf
    %511 = vmax.xlane.f32.xlu0 %v510
    %v512 = vpop.xlane.xlu0 %511
    %v513 = vsel %vm281, %v509, -inf
    %514 = vmax.xlane.f32.xlu0 %v513
    %v515 = vpop.xlane.xlu0 %514
    %v516 = vsub.f32 %v508, %v512
    %v517 = vsub.f32 %v509, %v515
    %v518 = vmul.f32 %v516, 1.442695
    %v519 = vpow.pop %v518
    %v520 = vmul.f32 %v517, 1.442695
    %v521 = vpow.pop %v520
    %v522 = vsel %vm281, %v519, 0.0
    %523 = vadd.xlane.f32.xlu0 %v522
    %v524 = vpop.xlane.xlu0 %523
    %v525 = vsel %vm281, %v521, 0.0
    %526 = vadd.xlane.f32.xlu0 %v525
    %v527 = vpop.xlane.xlu0 %526
    %v528 = vrcp.pop %v524
    %v529 = vmul.f32 %v519, %v528
    %v530 = vrcp.pop %v527
    %v531 = vmul.f32 %v521, %v530
    %v532 = vpack.c.bf16 %v529, %v529
    %v533 = vpack.c.bf16 %v531, %v531
    %534 = vrot.lane.b32.xlu0 %v143, 48
    %v535 = vpop.permute.xlu0 %534
    %v537 = vsel %vm281, %v532, 0
    %v540 = vsel %vm311, %v535, 0
    %542 = vmatprep.subr.bf16.mxu0 0
    %543 = vmatpush1.bf16.msra.mxu0 0
    %544 = vmatprep.subr.bf16.mxu0 0
    %545 = vmatpush1.bf16.msra.mxu0 0
    %546 = vmatprep.subr.bf16.mxu0 0
    %547 = vmatpush1.bf16.msra.mxu0 0
    %548 = vmatprep.subr.bf16.mxu0 0
    %549 = vmatpush1.bf16.msra.mxu0 0
    %550 = vmatprep.subr.bf16.mxu0 0
    %551 = vmatpush1.bf16.msra.mxu0 0
    %552 = vmatprep.subr.bf16.mxu0 0
    %553 = vmatpush1.bf16.msra.mxu0 0
    %554 = vmatprep.subr.bf16.mxu0 0
    %555 = vmatpush1.bf16.msra.mxu0 0
    %556 = vmatprep.subr.bf16.mxu0 0
    %557 = vmatpush1.bf16.msra.mxu0 %v540
    %558 = vmatprep.subr.bf16.mxu0 0
    %559 = vmatpush2.bf16.msra.mxu0 0
    %560 = vmatprep.subr.bf16.mxu0 0
    %561 = vmatpush2.bf16.msra.mxu0 0
    %562 = vmatprep.subr.bf16.mxu0 0
    %563 = vmatpush2.bf16.msra.mxu0 0
    %564 = vmatprep.subr.bf16.mxu0 0
    %565 = vmatpush2.bf16.msra.mxu0 0
    %566 = vmatprep.subr.bf16.mxu0 0
    %567 = vmatpush2.bf16.msra.mxu0 0
    %568 = vmatprep.subr.bf16.mxu0 0
    %569 = vmatpush2.bf16.msra.mxu0 0
    %570 = vmatprep.subr.bf16.mxu0 0
    %571 = vmatpush2.bf16.msra.mxu0 0
    %572 = vmatprep.subr.bf16.mxu0 0
    %573 = vmatpush2.bf16.msra.mxu0 0
    %574 = vmatprep.mubr.bf16.mxu0 0
    %575 = vmatmul.mubr.bf16.gmra.mxu0 %v537
    %v576 = vpop.f32.mrf.mxu0
    %v577 = vadd.f32 0.0, %v576
    %v578 = vpop.f32.mrf.mxu0
    %v579 = vpop.f32.mrf.mxu0
    %v580 = vpop.f32.mrf.mxu0
    %581 = vdwg.mxu0
    %582 = vrot.lane.b32.xlu0 %v144, 48
    %v583 = vpop.permute.xlu0 %582
    %v585 = vsel %vm281, %v533, 0
    %v588 = vsel %vm311, %v583, 0
    %590 = vmatprep.subr.bf16.mxu0 0
    %591 = vmatpush1.bf16.msra.mxu0 0
    %592 = vmatprep.subr.bf16.mxu0 0
    %593 = vmatpush1.bf16.msra.mxu0 0
    %594 = vmatprep.subr.bf16.mxu0 0
    %595 = vmatpush1.bf16.msra.mxu0 0
    %596 = vmatprep.subr.bf16.mxu0 0
    %597 = vmatpush1.bf16.msra.mxu0 0
    %598 = vmatprep.subr.bf16.mxu0 0
    %599 = vmatpush1.bf16.msra.mxu0 0
    %600 = vmatprep.subr.bf16.mxu0 0
    %601 = vmatpush1.bf16.msra.mxu0 0
    %602 = vmatprep.subr.bf16.mxu0 0
    %603 = vmatpush1.bf16.msra.mxu0 0
    %604 = vmatprep.subr.bf16.mxu0 0
    %605 = vmatpush1.bf16.msra.mxu0 %v588
    %606 = vmatprep.subr.bf16.mxu0 0
    %607 = vmatpush2.bf16.msra.mxu0 0
    %608 = vmatprep.subr.bf16.mxu0 0
    %609 = vmatpush2.bf16.msra.mxu0 0
    %610 = vmatprep.subr.bf16.mxu0 0
    %611 = vmatpush2.bf16.msra.mxu0 0
    %612 = vmatprep.subr.bf16.mxu0 0
    %613 = vmatpush2.bf16.msra.mxu0 0
    %614 = vmatprep.subr.bf16.mxu0 0
    %615 = vmatpush2.bf16.msra.mxu0 0
    %616 = vmatprep.subr.bf16.mxu0 0
    %617 = vmatpush2.bf16.msra.mxu0 0
    %618 = vmatprep.subr.bf16.mxu0 0
    %619 = vmatpush2.bf16.msra.mxu0 0
    %620 = vmatprep.subr.bf16.mxu0 0
    %621 = vmatpush2.bf16.msra.mxu0 0
    %622 = vmatprep.mubr.bf16.mxu0 0
    %623 = vmatmul.mubr.bf16.gmra.mxu0 %v585
    %v624 = vpop.f32.mrf.mxu0
    %v625 = vadd.f32 0.0, %v624
    %v626 = vpop.f32.mrf.mxu0
    %v627 = vpop.f32.mrf.mxu0
    %v628 = vpop.f32.mrf.mxu0
    %629 = vdwg.mxu0
    %v630 = vpack.c.bf16 %v625, %v577
    %v631 = vld [vmem:[%s5 + $0x8] sm:$0xf]
    %v632 = vld [vmem:[%s5 + $0xc] sm:$0xf]
    %v635 = vunpack.c.l.b16 %v631
    %v636 = vunpack.c.l.b16 %v632
    %v637 = vpack.c.b16 %v636, %v635
    %v640 = vsel %vm148, %v630, 0
    %642 = vmatprep.subr.bf16.mxu0 0
    %643 = vmatpush1.bf16.msra.mxu0 0
    %644 = vmatprep.subr.bf16.mxu0 0
    %645 = vmatpush1.bf16.msra.mxu0 0
    %646 = vmatprep.subr.bf16.mxu0 0
    %647 = vmatpush1.bf16.msra.mxu0 0
    %648 = vmatprep.subr.bf16.mxu0 0
    %649 = vmatpush1.bf16.msra.mxu0 0
    %650 = vmatprep.subr.bf16.mxu0 0
    %651 = vmatpush1.bf16.msra.mxu0 0
    %652 = vmatprep.subr.bf16.mxu0 0
    %653 = vmatpush1.bf16.msra.mxu0 0
    %654 = vmatprep.subr.bf16.mxu0 0
    %655 = vmatpush1.bf16.msra.mxu0 0
    %656 = vmatprep.subr.bf16.mxu0 0
    %657 = vmatpush1.bf16.msra.mxu0 %v637
    %658 = vmatprep.subr.bf16.mxu0 0
    %659 = vmatpush2.bf16.msra.mxu0 0
    %660 = vmatprep.subr.bf16.mxu0 0
    %661 = vmatpush2.bf16.msra.mxu0 0
    %662 = vmatprep.subr.bf16.mxu0 0
    %663 = vmatpush2.bf16.msra.mxu0 0
    %664 = vmatprep.subr.bf16.mxu0 0
    %665 = vmatpush2.bf16.msra.mxu0 0
    %666 = vmatprep.subr.bf16.mxu0 0
    %667 = vmatpush2.bf16.msra.mxu0 0
    %668 = vmatprep.subr.bf16.mxu0 0
    %669 = vmatpush2.bf16.msra.mxu0 0
    %670 = vmatprep.subr.bf16.mxu0 0
    %671 = vmatpush2.bf16.msra.mxu0 0
    %672 = vmatprep.subr.bf16.mxu0 0
    %673 = vmatpush2.bf16.msra.mxu0 0
    %674 = vmatprep.mubr.bf16.mxu0 0
    %675 = vmatmul.mubr.bf16.gmra.mxu0 %v640
    %v676 = vpop.f32.mrf.mxu0
    %v677 = vadd.f32 0.0, %v676
    %v678 = vpop.f32.mrf.mxu0
    %v679 = vpop.f32.mrf.mxu0
    %v680 = vadd.f32 0.0, %v679
    %v681 = vpop.f32.mrf.mxu0
    %682 = vdwg.mxu0
    %v685 = vunpack.c.l.b16 %v404
    %v686 = vunpack.c.l.b16 %v405
    %v687 = vpack.c.b16 %v686, %v685
    %v690 = vsel %vm148, %v403, 0
    %692 = vmatprep.subr.bf16.mxu0 0
    %693 = vmatpush1.bf16.msra.mxu0 0
    %694 = vmatprep.subr.bf16.mxu0 0
    %695 = vmatpush1.bf16.msra.mxu0 0
    %696 = vmatprep.subr.bf16.mxu0 0
    %697 = vmatpush1.bf16.msra.mxu0 0
    %698 = vmatprep.subr.bf16.mxu0 0
    %699 = vmatpush1.bf16.msra.mxu0 0
    %700 = vmatprep.subr.bf16.mxu0 0
    %701 = vmatpush1.bf16.msra.mxu0 0
    %702 = vmatprep.subr.bf16.mxu0 0
    %703 = vmatpush1.bf16.msra.mxu0 0
    %704 = vmatprep.subr.bf16.mxu0 0
    %705 = vmatpush1.bf16.msra.mxu0 0
    %706 = vmatprep.subr.bf16.mxu0 0
    %707 = vmatpush1.bf16.msra.mxu0 %v687
    %708 = vmatprep.subr.bf16.mxu0 0
    %709 = vmatpush2.bf16.msra.mxu0 0
    %710 = vmatprep.subr.bf16.mxu0 0
    %711 = vmatpush2.bf16.msra.mxu0 0
    %712 = vmatprep.subr.bf16.mxu0 0
    %713 = vmatpush2.bf16.msra.mxu0 0
    %714 = vmatprep.subr.bf16.mxu0 0
    %715 = vmatpush2.bf16.msra.mxu0 0
    %716 = vmatprep.subr.bf16.mxu0 0
    %717 = vmatpush2.bf16.msra.mxu0 0
    %718 = vmatprep.subr.bf16.mxu0 0
    %719 = vmatpush2.bf16.msra.mxu0 0
    %720 = vmatprep.subr.bf16.mxu0 0
    %721 = vmatpush2.bf16.msra.mxu0 0
    %722 = vmatprep.subr.bf16.mxu0 0
    %723 = vmatpush2.bf16.msra.mxu0 0
    %724 = vmatprep.mubr.bf16.mxu0 0
    %725 = vmatmul.mubr.bf16.gmra.mxu0 %v690
    %v726 = vpop.f32.mrf.mxu0
    %v727 = vadd.f32 %v677, %v726
    %v728 = vpop.f32.mrf.mxu0
    %v729 = vpop.f32.mrf.mxu0
    %v730 = vadd.f32 %v680, %v729
    %v731 = vpop.f32.mrf.mxu0
    %732 = vdwg.mxu0
    %v733 = vld [vmem:[%s6] sm:$0x1]
    %v735 = vlaneseq
    %v736 = vshrl.u32 %v735, 7
    %v737 = vsub.s32 0, %v736
    %v738 = vrot.slane %v733, %v737
    %v740 = vadd.f32 %v727, %v738
    %v741 = vadd.f32 %v730, %v738
    %v742 = vadd.f32 %v64, %v740
    %v743 = vadd.f32 %v65, %v741
    %v744 = vld [vmem:[%s7] sm:$0x1]
    %v745 = vld [vmem:[%s8] sm:$0x1]
    %v746 = vsel %vm98, %v742, 0.0
    %747 = vadd.xlane.f32.xlu0 %v746
    %v748 = vpop.xlane.xlu0 %747
    %v749 = vsel %vm98, %v743, 0.0
    %750 = vadd.xlane.f32.xlu0 %v749
    %v751 = vpop.xlane.xlu0 %750
    %v752 = vrcp.pop 32.0
    %v753 = vmul.f32 %v748, %v752
    %v754 = vmul.f32 %v751, %v752
    %v755 = vsub.f32 %v742, %v753
    %v756 = vsub.f32 %v743, %v754
    %v757 = vmul.f32 %v755, %v755
    %v758 = vmul.f32 %v756, %v756
    %v759 = vsel %vm98, %v757, 0.0
    %760 = vadd.xlane.f32.xlu0 %v759
    %v761 = vpop.xlane.xlu0 %760
    %v762 = vsel %vm98, %v758, 0.0
    %763 = vadd.xlane.f32.xlu0 %v762
    %v764 = vpop.xlane.xlu0 %763
    %v765 = vmul.f32 %v761, %v752
    %v766 = vmul.f32 %v764, %v752
    %v767 = vadd.f32 %v765, 1e-12
    %v768 = vadd.f32 %v766, 1e-12
    %v769 = vrsqrt.pop %v767
    %v770 = vrsqrt.pop %v768
    %v771 = vmul.f32 %v755, %v769
    %v772 = vmul.f32 %v756, %v770
    %v774 = vlaneseq
    %v775 = vshrl.u32 %v774, 7
    %v776 = vsub.s32 0, %v775
    %v777 = vrot.slane %v744, %v776
    %v779 = vmul.f32 %v771, %v777
    %v780 = vmul.f32 %v772, %v777
    %v782 = vlaneseq
    %v783 = vshrl.u32 %v782, 7
    %v784 = vsub.s32 0, %v783
    %v785 = vrot.slane %v745, %v784
    %v787 = vadd.f32 %v779, %v785
    %v788 = vadd.f32 %v780, %v785
    %v789 = vpack.c.bf16 %v788, %v787
    %v790 = vld [vmem:[%s9] sm:$0xf]
    %v791 = vld [vmem:[%s9 + $0x4] sm:$0xf]
    %v792 = vld [vmem:[%s9 + $0x8] sm:$0xf]
    %v793 = vld [vmem:[%s9 + $0xc] sm:$0xf]
    %v794 = vld [vmem:[%s10] sm:$0x1]
    %v796 = vlaneseq
    %v797 = vshrl.u32 %v796, 7
    %v798 = vsub.s32 0, %v797
    %v799 = vrot.slane %v794, %v798
    %v805 = vunpack.c.l.b16 %v790
    %v806 = vunpack.c.l.b16 %v791
    %v807 = vunpack.c.l.b16 %v792
    %v808 = vunpack.c.l.b16 %v793
    %v809 = vpack.c.b16 %v806, %v805
    %v810 = vpack.c.b16 %v808, %v807
    %v814 = vsel %vm98, %v789, 0
    %816 = vmatprep.subr.bf16.mxu0 0
    %817 = vmatpush1.bf16.msra.mxu0 0
    %818 = vmatprep.subr.bf16.mxu0 0
    %819 = vmatpush1.bf16.msra.mxu0 0
    %820 = vmatprep.subr.bf16.mxu0 0
    %821 = vmatpush1.bf16.msra.mxu0 0
    %822 = vmatprep.subr.bf16.mxu0 0
    %823 = vmatpush1.bf16.msra.mxu0 0
    %824 = vmatprep.subr.bf16.mxu0 0
    %825 = vmatpush1.bf16.msra.mxu0 0
    %826 = vmatprep.subr.bf16.mxu0 0
    %827 = vmatpush1.bf16.msra.mxu0 0
    %828 = vmatprep.subr.bf16.mxu0 0
    %829 = vmatpush1.bf16.msra.mxu0 %v810
    %830 = vmatprep.subr.bf16.mxu0 0
    %831 = vmatpush1.bf16.msra.mxu0 %v809
    %832 = vmatprep.subr.bf16.mxu0 0
    %833 = vmatpush2.bf16.msra.mxu0 0
    %834 = vmatprep.subr.bf16.mxu0 0
    %835 = vmatpush2.bf16.msra.mxu0 0
    %836 = vmatprep.subr.bf16.mxu0 0
    %837 = vmatpush2.bf16.msra.mxu0 0
    %838 = vmatprep.subr.bf16.mxu0 0
    %839 = vmatpush2.bf16.msra.mxu0 0
    %840 = vmatprep.subr.bf16.mxu0 0
    %841 = vmatpush2.bf16.msra.mxu0 0
    %842 = vmatprep.subr.bf16.mxu0 0
    %843 = vmatpush2.bf16.msra.mxu0 0
    %844 = vmatprep.subr.bf16.mxu0 0
    %845 = vmatpush2.bf16.msra.mxu0 0
    %846 = vmatprep.subr.bf16.mxu0 0
    %847 = vmatpush2.bf16.msra.mxu0 0
    %848 = vmatprep.mubr.bf16.mxu0 0
    %849 = vmatmul.mubr.bf16.gmra.mxu0 %v814
    %v850 = vpop.f32.mrf.mxu0
    %v851 = vadd.f32 %v799, %v850
    %v852 = vpop.f32.mrf.mxu0
    %v853 = vpop.f32.mrf.mxu0
    %v854 = vadd.f32 %v799, %v853
    %v855 = vpop.f32.mrf.mxu0
    %856 = vdwg.mxu0
    %v857 = vmul.f32 %v851, 0.5
    %v858 = vmul.f32 %v854, 0.5
    %v859 = vmul.f32 %v851, 0.044715
    %v860 = vmul.f32 %v854, 0.044715
    %v861 = vmul.f32 %v859, %v851
    %v862 = vmul.f32 %v860, %v854
    %v863 = vmul.f32 %v861, %v851
    %v864 = vmul.f32 %v862, %v854
    %v865 = vadd.f32 %v851, %v863
    %v866 = vadd.f32 %v854, %v864
    %v867 = vmul.f32 %v865, 0.7978846
    %v868 = vmul.f32 %v866, 0.7978846
    %v869 = vtanh.pop %v867
    %v870 = vtanh.pop %v868
    %v871 = vadd.f32 %v869, 1.0
    %v872 = vadd.f32 %v870, 1.0
    %v873 = vmul.f32 %v857, %v871
    %v874 = vmul.f32 %v858, %v872
    %v875 = vpack.c.bf16 %v874, %v873
    %v876 = vld [vmem:[%s11] sm:$0xf]
    %v877 = vld [vmem:[%s11 + $0x4] sm:$0xf]
    %v878 = vld [vmem:[%s11 + $0x8] sm:$0xf]
    %v879 = vld [vmem:[%s11 + $0xc] sm:$0xf]
    %v880 = vld [vmem:[%s11 + $0x10] sm:$0xf]
    %v881 = vld [vmem:[%s11 + $0x14] sm:$0xf]
    %v882 = vld [vmem:[%s11 + $0x18] sm:$0xf]
    %v883 = vld [vmem:[%s11 + $0x1c] sm:$0xf]
    %v884 = vld [vmem:[%s11 + $0x20] sm:$0xf]
    %v885 = vld [vmem:[%s11 + $0x24] sm:$0xf]
    %v886 = vld [vmem:[%s11 + $0x28] sm:$0xf]
    %v887 = vld [vmem:[%s11 + $0x2c] sm:$0xf]
    %v888 = vld [vmem:[%s11 + $0x30] sm:$0xf]
    %v889 = vld [vmem:[%s11 + $0x34] sm:$0xf]
    %v890 = vld [vmem:[%s11 + $0x38] sm:$0xf]
    %v891 = vld [vmem:[%s11 + $0x3c] sm:$0xf]
    %v892 = vld [vmem:[%s12] sm:$0x1]
    %v894 = vlaneseq
    %v895 = vshrl.u32 %v894, 7
    %v896 = vsub.s32 0, %v895
    %v897 = vrot.slane %v892, %v896
    %v915 = vunpack.c.l.b16 %v876
    %v916 = vunpack.c.l.b16 %v877
    %v917 = vunpack.c.l.b16 %v878
    %v918 = vunpack.c.l.b16 %v879
    %v919 = vunpack.c.l.b16 %v880
    %v920 = vunpack.c.l.b16 %v881
    %v921 = vunpack.c.l.b16 %v882
    %v922 = vunpack.c.l.b16 %v883
    %v923 = vunpack.c.l.b16 %v884
    %v924 = vunpack.c.l.b16 %v885
    %v925 = vunpack.c.l.b16 %v886
    %v926 = vunpack.c.l.b16 %v887
    %v927 = vunpack.c.l.b16 %v888
    %v928 = vunpack.c.l.b16 %v889
    %v929 = vunpack.c.l.b16 %v890
    %v930 = vunpack.c.l.b16 %v891
    %v931 = vpack.c.b16 %v916, %v915
    %v932 = vpack.c.b16 %v918, %v917
    %v933 = vpack.c.b16 %v920, %v919
    %v934 = vpack.c.b16 %v922, %v921
    %v935 = vpack.c.b16 %v924, %v923
    %v936 = vpack.c.b16 %v926, %v925
    %v937 = vpack.c.b16 %v928, %v927
    %v938 = vpack.c.b16 %v930, %v929
    %947 = vmatprep.subr.bf16.mxu0 0
    %948 = vmatpush1.bf16.msra.mxu0 %v938
    %949 = vmatprep.subr.bf16.mxu0 0
    %950 = vmatpush1.bf16.msra.mxu0 %v937
    %951 = vmatprep.subr.bf16.mxu0 0
    %952 = vmatpush1.bf16.msra.mxu0 %v936
    %953 = vmatprep.subr.bf16.mxu0 0
    %954 = vmatpush1.bf16.msra.mxu0 %v935
    %955 = vmatprep.subr.bf16.mxu0 0
    %956 = vmatpush1.bf16.msra.mxu0 %v934
    %957 = vmatprep.subr.bf16.mxu0 0
    %958 = vmatpush1.bf16.msra.mxu0 %v933
    %959 = vmatprep.subr.bf16.mxu0 0
    %960 = vmatpush1.bf16.msra.mxu0 %v932
    %961 = vmatprep.subr.bf16.mxu0 0
    %962 = vmatpush1.bf16.msra.mxu0 %v931
    %963 = vmatprep.subr.bf16.mxu0 0
    %964 = vmatpush2.bf16.msra.mxu0 0
    %965 = vmatprep.subr.bf16.mxu0 0
    %966 = vmatpush2.bf16.msra.mxu0 0
    %967 = vmatprep.subr.bf16.mxu0 0
    %968 = vmatpush2.bf16.msra.mxu0 0
    %969 = vmatprep.subr.bf16.mxu0 0
    %970 = vmatpush2.bf16.msra.mxu0 0
    %971 = vmatprep.subr.bf16.mxu0 0
    %972 = vmatpush2.bf16.msra.mxu0 0
    %973 = vmatprep.subr.bf16.mxu0 0
    %974 = vmatpush2.bf16.msra.mxu0 0
    %975 = vmatprep.subr.bf16.mxu0 0
    %976 = vmatpush2.bf16.msra.mxu0 0
    %977 = vmatprep.subr.bf16.mxu0 0
    %978 = vmatpush2.bf16.msra.mxu0 0
    %979 = vmatprep.mubr.bf16.mxu0 0
    %980 = vmatmul.mubr.bf16.gmra.mxu0 %v875
    %v981 = vpop.f32.mrf.mxu0
    %v982 = vadd.f32 %v897, %v981
    %v983 = vpop.f32.mrf.mxu0
    %v984 = vpop.f32.mrf.mxu0
    %v985 = vadd.f32 %v897, %v984
    %v986 = vpop.f32.mrf.mxu0
    %987 = vdwg.mxu0
    %v988 = vadd.f32 %v787, %v982
    %v989 = vadd.f32 %v788, %v985
    %v990 = vld [vmem:[%s13] sm:$0x1]
    %v991 = vld [vmem:[%s14] sm:$0x1]
    %v992 = vsel %vm98, %v988, 0.0
    %993 = vadd.xlane.f32.xlu0 %v992
    %v994 = vpop.xlane.xlu0 %993
    %v995 = vsel %vm98, %v989, 0.0
    %996 = vadd.xlane.f32.xlu0 %v995
    %v997 = vpop.xlane.xlu0 %996
    %v998 = vmul.f32 %v994, %v752
    %v999 = vmul.f32 %v997, %v752
    %v1000 = vsub.f32 %v988, %v998
    %v1001 = vsub.f32 %v989, %v999
    %v1002 = vmul.f32 %v1000, %v1000
    %v1003 = vmul.f32 %v1001, %v1001
    %v1004 = vsel %vm98, %v1002, 0.0
    %1005 = vadd.xlane.f32.xlu0 %v1004
    %v1006 = vpop.xlane.xlu0 %1005
    %v1007 = vsel %vm98, %v1003, 0.0
    %1008 = vadd.xlane.f32.xlu0 %v1007
    %v1009 = vpop.xlane.xlu0 %1008
    %v1010 = vmul.f32 %v1006, %v752
    %v1011 = vmul.f32 %v1009, %v752
    %v1012 = vadd.f32 %v1010, 1e-12
    %v1013 = vadd.f32 %v1011, 1e-12
    %v1014 = vrsqrt.pop %v1012
    %v1015 = vrsqrt.pop %v1013
    %v1016 = vmul.f32 %v1000, %v1014
    %v1017 = vmul.f32 %v1001, %v1015
    %v1019 = vlaneseq
    %v1020 = vshrl.u32 %v1019, 7
    %v1021 = vsub.s32 0, %v1020
    %v1022 = vrot.slane %v990, %v1021
    %v1024 = vmul.f32 %v1016, %v1022
    %v1025 = vmul.f32 %v1017, %v1022
    %v1027 = vlaneseq
    %v1028 = vshrl.u32 %v1027, 7
    %v1029 = vsub.s32 0, %v1028
    %v1030 = vrot.slane %v991, %v1029
    %v1032 = vadd.f32 %v1024, %v1030
    %v1033 = vadd.f32 %v1025, %v1030
    %v1034 = vpack.c.bf16 %v1032, %v1032
    %v1035 = vpack.c.bf16 %v1033, %v1033
    %v1036 = vld [vmem:[%s15] sm:$0xf]
    %v1037 = vld [vmem:[%s15 + $0x4] sm:$0xf]
    %v1038 = vld [vmem:[%s15 + $0x8] sm:$0xf]
    %v1039 = vld [vmem:[%s15 + $0xc] sm:$0xf]
    %v1040 = vld [vmem:[%s16] sm:$0x1]
    %v1042 = vlaneseq
    %v1043 = vshrl.u32 %v1042, 7
    %v1044 = vsub.s32 0, %v1043
    %v1045 = vrot.slane %v1040, %v1044
    %v1049 = vunpack.c.l.b16 %v1034
    %v1050 = vunpack.c.l.b16 %v1035
    %v1051 = vrot.slane %v1050, 7
    %vm1052 = vcmask 1041409
    %v1053 = vsel %vm1052, %v1051, %v1049
    %v1054 = vpack.c.b16 %v1053, %v1053
    %v1059 = vunpack.c.l.b16 %v1036
    %v1060 = vunpack.c.l.b16 %v1037
    %v1061 = vunpack.c.l.b16 %v1038
    %v1062 = vunpack.c.l.b16 %v1039
    %v1063 = vpack.c.b16 %v1060, %v1059
    %v1064 = vpack.c.b16 %v1062, %v1061
    %v1068 = vsel %vm98, %v1054, 0
    %1070 = vmatprep.subr.bf16.mxu0 0
    %1071 = vmatpush1.bf16.msra.mxu0 0
    %1072 = vmatprep.subr.bf16.mxu0 0
    %1073 = vmatpush1.bf16.msra.mxu0 0
    %1074 = vmatprep.subr.bf16.mxu0 0
    %1075 = vmatpush1.bf16.msra.mxu0 0
    %1076 = vmatprep.subr.bf16.mxu0 0
    %1077 = vmatpush1.bf16.msra.mxu0 0
    %1078 = vmatprep.subr.bf16.mxu0 0
    %1079 = vmatpush1.bf16.msra.mxu0 0
    %1080 = vmatprep.subr.bf16.mxu0 0
    %1081 = vmatpush1.bf16.msra.mxu0 0
    %1082 = vmatprep.subr.bf16.mxu0 0
    %1083 = vmatpush1.bf16.msra.mxu0 %v1064
    %1084 = vmatprep.subr.bf16.mxu0 0
    %1085 = vmatpush1.bf16.msra.mxu0 %v1063
    %1086 = vmatprep.subr.bf16.mxu0 0
    %1087 = vmatpush2.bf16.msra.mxu0 0
    %1088 = vmatprep.subr.bf16.mxu0 0
    %1089 = vmatpush2.bf16.msra.mxu0 0
    %1090 = vmatprep.subr.bf16.mxu0 0
    %1091 = vmatpush2.bf16.msra.mxu0 0
    %1092 = vmatprep.subr.bf16.mxu0 0
    %1093 = vmatpush2.bf16.msra.mxu0 0
    %1094 = vmatprep.subr.bf16.mxu0 0
    %1095 = vmatpush2.bf16.msra.mxu0 0
    %1096 = vmatprep.subr.bf16.mxu0 0
    %1097 = vmatpush2.bf16.msra.mxu0 0
    %1098 = vmatprep.subr.bf16.mxu0 0
    %1099 = vmatpush2.bf16.msra.mxu0 0
    %1100 = vmatprep.subr.bf16.mxu0 0
    %1101 = vmatpush2.bf16.msra.mxu0 0
    %1102 = vmatprep.mubr.bf16.mxu0 0
    %1103 = vmatmul.mubr.bf16.gmra.mxu0 %v1068
    %v1104 = vpop.f32.mrf.mxu0
    %v1105 = vadd.f32 %v1045, %v1104
    %v1106 = vpop.f32.mrf.mxu0
    %v1107 = vpop.f32.mrf.mxu0
    %v1108 = vpop.f32.mrf.mxu0
    %1109 = vdwg.mxu0
    %v1110 = vtanh.pop %v1105
    %v1111 = vld [vmem:[%s2] sm:$0x3]
    %vm1112 = vcmp.ge.u32.totalorder %v1111, 2147483648
    %v1113 = vsel %vm1112, 1, 0
    %v1114 = vcvt.s32.f32 %v1113
    %v1115 = vmul.f32 %v1110, %v1114
    %v1116 = vmul.f32 %v1115, 2.0
    %v1117 = vpack.c.bf16 %v1116, %v1116
    %v1118 = vld [vmem:[%s17] sm:$0xf]
    %v1119 = vld [vmem:[%s17 + $0x4] sm:$0xf]
    %v1120 = vld [vmem:[%s17 + $0x8] sm:$0xf]
    %v1121 = vld [vmem:[%s17 + $0xc] sm:$0xf]
    %v1122 = vld [vmem:[%s18] sm:$0x1]
    %v1124 = vlaneseq
    %v1125 = vshrl.u32 %v1124, 7
    %v1126 = vsub.s32 0, %v1125
    %v1127 = vrot.slane %v1122, %v1126
    %v1133 = vunpack.c.l.b16 %v1118
    %v1134 = vunpack.c.l.b16 %v1119
    %v1135 = vunpack.c.l.b16 %v1120
    %v1136 = vunpack.c.l.b16 %v1121
    %v1137 = vpack.c.b16 %v1134, %v1133
    %v1138 = vpack.c.b16 %v1136, %v1135
    %v1142 = vsel %vm98, %v1117, 0
    %1144 = vmatprep.subr.bf16.mxu0 0
    %1145 = vmatpush1.bf16.msra.mxu0 0
    %1146 = vmatprep.subr.bf16.mxu0 0
    %1147 = vmatpush1.bf16.msra.mxu0 0
    %1148 = vmatprep.subr.bf16.mxu0 0
    %1149 = vmatpush1.bf16.msra.mxu0 0
    %1150 = vmatprep.subr.bf16.mxu0 0
    %1151 = vmatpush1.bf16.msra.mxu0 0
    %1152 = vmatprep.subr.bf16.mxu0 0
    %1153 = vmatpush1.bf16.msra.mxu0 0
    %1154 = vmatprep.subr.bf16.mxu0 0
    %1155 = vmatpush1.bf16.msra.mxu0 0
    %1156 = vmatprep.subr.bf16.mxu0 0
    %1157 = vmatpush1.bf16.msra.mxu0 %v1138
    %1158 = vmatprep.subr.bf16.mxu0 0
    %1159 = vmatpush1.bf16.msra.mxu0 %v1137
    %1160 = vmatprep.subr.bf16.mxu0 0
    %1161 = vmatpush2.bf16.msra.mxu0 0
    %1162 = vmatprep.subr.bf16.mxu0 0
    %1163 = vmatpush2.bf16.msra.mxu0 0
    %1164 = vmatprep.subr.bf16.mxu0 0
    %1165 = vmatpush2.bf16.msra.mxu0 0
    %1166 = vmatprep.subr.bf16.mxu0 0
    %1167 = vmatpush2.bf16.msra.mxu0 0
    %1168 = vmatprep.subr.bf16.mxu0 0
    %1169 = vmatpush2.bf16.msra.mxu0 0
    %1170 = vmatprep.subr.bf16.mxu0 0
    %1171 = vmatpush2.bf16.msra.mxu0 0
    %1172 = vmatprep.subr.bf16.mxu0 0
    %1173 = vmatpush2.bf16.msra.mxu0 0
    %1174 = vmatprep.subr.bf16.mxu0 0
    %1175 = vmatpush2.bf16.msra.mxu0 0
    %1176 = vmatprep.mubr.bf16.mxu0 0
    %1177 = vmatmul.mubr.bf16.gmra.mxu0 %v1142
    %v1178 = vpop.f32.mrf.mxu0
    %v1179 = vadd.f32 %v1127, %v1178
    %v1180 = vpop.f32.mrf.mxu0
    %v1181 = vpop.f32.mrf.mxu0
    %v1182 = vpop.f32.mrf.mxu0
    %1183 = vdwg.mxu0
    %vm1184 = vcmask 82944
    %1185 = vst.msk [vmem:[#allocation2] sm:$0x3] %vm1184, %v1179
    // Predicated region
    $region78: #{tpu_custom_call.1} parent=1 // pred_check
      _
    $region79: #{tpu_custom_call.1} parent=1 // pred_check_branch
      %1187 = sbr.rel (0) target = $region81
    $region80: #{tpu_custom_call.1} parent=1 // pred_region
      %s1189 = ssub.s32 32, 32
      %1190 = vsyncadd [#allocation3], %s1189
      %s1192 = sshll.u32 [#allocation2], 4
      %s1193 = int_to_ptr.vmem [resolvable:$true] %s1192
      %1195 = dma.vmem_to_hbm [thread:$0]  %s1193, 32, %s19, [#allocation3]
    $region81: #{tpu_custom_call.1} parent=1 // pred_fallthru
      _
    // Predicated region
    $region82: #{tpu_custom_call.1} parent=1 // pred_check
      _
    $region83: #{tpu_custom_call.1} parent=1 // pred_check_branch
      %1197 = sbr.rel (0) target = $region85
    $region84: #{tpu_custom_call.1} parent=1 // pred_region
      %1198 = dma.done [#allocation3], 32
    $region85: #{tpu_custom_call.1} parent=1 // pred_fallthru
      _
    %1199 = vsyncpa [#allocation3], 1

</llo_original>
